<compile_context>
chip_gen: v6e
topology: v6e:2x2x1
jax: 0.10.0
libtpu: 0.0.40
codegen_flags: <defaults>
</compile_context>

<pallas_src>
import jax
import jax.numpy as jnp
from jax.experimental import pallas as pl
from jax.experimental.pallas import tpu as pltpu


def _make_conv_kernel(stride, Hout, Wout, Cin, Cout, out_layout):
    """3x3 conv (pad=1) + bias + per-channel PReLU for one image, in-kernel im2col.

    The input ref holds the zero-padded activation pre-split into stride*stride
    spatial phases so every tap is a unit-stride slice:
        stride 1 : x_ref[0, kh:kh+Hout, kw:kw+Wout, :]
        stride 2 : x_ref[(kh%2)*2+(kw%2), kh//2:kh//2+Hout, kw//2:kw//2+Wout, :]
    """
    taps = []
    for kh in range(3):
        for kw in range(3):
            if stride == 1:
                taps.append((0, kh, kw))
            else:
                taps.append(((kh % 2) * 2 + (kw % 2), kh // 2, kw // 2))
    M = Hout * Wout

    def kernel(x_ref, w_ref, b_ref, a_ref, o_ref):
        acc = jnp.zeros((M, Cout), jnp.float32)
        for t, (p, dh, dw) in enumerate(taps):
            slab = x_ref[p, dh:dh + Hout, dw:dw + Wout, :]     # (Hout, Wout, Cin) bf16
            slab = slab.reshape(M, Cin)
            acc = acc + jnp.dot(slab, w_ref[t],                # bf16 x bf16 -> f32 acc
                                preferred_element_type=jnp.float32)
        y = acc + b_ref[...]                                   # (M, Cout) f32
        alpha = a_ref[...]
        y = jnp.where(y > 0, y, alpha * y)                     # PReLU in f32
        if out_layout == "nhwc":
            # Intermediate activation, consumed by the next conv (bf16).
            o_ref[...] = y.reshape(1, Hout, Wout, Cout).astype(jnp.bfloat16)
        else:
            # Block output: channel-leading, lane-dense (Cout, Hout*Wout), f32.
            o_ref[...] = y.T.reshape(1, Cout, M)

    return kernel


def conv3x3_prelu(x_nhwc, w, b, alpha, stride, out_layout):
    """One conv3x3(pad=1, stride) + PReLU as a single pallas_call.

    x_nhwc: (N, H, W, Cin) bf16;  w: (3,3,Cin,Cout) f32;  b, alpha: (Cout,) f32.
    out_layout == "nhwc": returns (N, Hout, Wout, Cout) bf16 (feeds next conv).
    out_layout == "nchw": returns (N, Cout, Hout, Wout) f32 (block output).
    """
    N, H, W, Cin = x_nhwc.shape
    Cout = w.shape[-1]
    Hout = (H + 2 - 3) // stride + 1
    Wout = (W + 2 - 3) // stride + 1
    M = Hout * Wout
    S2 = stride * stride

    # 1-px zero pad + (stride 2) space-to-depth phase split.  Pure XLA slicing,
    # ~1x the input bytes -- the old 9x im2col HBM expansion is gone.
    xp = jnp.pad(x_nhwc, ((0, 0), (1, 1), (1, 1), (0, 0)))
    if stride == 1:
        Hq, Wq = H + 2, W + 2
        phases = xp[:, None]                                   # (N, 1, Hq, Wq, Cin)
    else:
        Hq, Wq = Hout + 1, Wout + 1
        ph = []
        for pa in range(2):
            for pb in range(2):
                sub = xp[:, pa::2, pb::2, :][:, :Hq, :Wq, :]
                sub = jnp.pad(sub, ((0, 0), (0, Hq - sub.shape[1]),
                                    (0, Wq - sub.shape[2]), (0, 0)))
                ph.append(sub)
        phases = jnp.stack(ph, axis=1)                         # (N, 4, Hq, Wq, Cin)
    phases = phases.reshape(N * S2, Hq, Wq, Cin)

    wm = w.reshape(9, Cin, Cout).astype(jnp.bfloat16)          # tap-major (kh*3+kw)
    b2 = b.reshape(1, Cout).astype(jnp.float32)
    a2 = alpha.reshape(1, Cout).astype(jnp.float32)

    if out_layout == "nhwc":
        out_shape = jax.ShapeDtypeStruct((N, Hout, Wout, Cout), jnp.bfloat16)
        out_spec = pl.BlockSpec((1, Hout, Wout, Cout), lambda n: (n, 0, 0, 0))
        out_bytes = N * M * Cout * 2
    else:
        out_shape = jax.ShapeDtypeStruct((N, Cout, M), jnp.float32)
        out_spec = pl.BlockSpec((1, Cout, M), lambda n: (n, 0, 0))
        out_bytes = N * M * Cout * 4

    cost = pl.CostEstimate(
        flops=2 * N * M * 9 * Cin * Cout,
        transcendentals=0,
        bytes_accessed=int(phases.size) * 2 + int(wm.size) * 2
        + 2 * Cout * 4 + out_bytes)

    kernel = _make_conv_kernel(stride, Hout, Wout, Cin, Cout, out_layout)

    # NOTE: whole-image blocks fit the scoped-VMEM defaults comfortably at
    # these sizes (v5e 16 MiB / v6e 32 MiB / v7x 32 MiB of 64 MiB physical);
    # for very large inputs set vmem_limit_bytes and/or tile rows (see TODOs).
    out = pl.pallas_call(
        kernel,
        out_shape=out_shape,
        grid_spec=pl.GridSpec(
            grid=(N,),
            in_specs=[
                pl.BlockSpec((S2, Hq, Wq, Cin), lambda n: (n, 0, 0, 0)),
                pl.BlockSpec((9, Cin, Cout), lambda n: (0, 0, 0)),
                pl.BlockSpec((1, Cout), lambda n: (0, 0)),
                pl.BlockSpec((1, Cout), lambda n: (0, 0)),
            ],
            out_specs=out_spec,
        ),
        compiler_params=pltpu.CompilerParams(
            dimension_semantics=("parallel",)),
        cost_estimate=cost,
    )(phases, wm, b2, a2)

    if out_layout == "nhwc":
        return out
    return out.reshape(N, Cout, Hout, Wout)


def init_feat_pyramid(key, channels=(16, 32, 64), depths=(3, 3, 3)):
    """Deterministic synthetic parameters matching the PyTorch module shapes."""
    assert len(channels) == len(depths)
    chans = (3,) + tuple(channels)
    params = []
    for i in range(len(chans) - 1):
        cin, cout = chans[i], chans[i + 1]
        layers = []
        for d in range(depths[i]):
            lcin = cin if d == 0 else cout
            key, kw, kb = jax.random.split(key, 3)
            fan_in = 9 * lcin
            w = jax.random.normal(kw, (3, 3, lcin, cout), jnp.float32) / jnp.sqrt(
                jnp.float32(fan_in))
            b = jax.random.normal(kb, (cout,), jnp.float32) * 0.01
            alpha = jnp.full((cout,), 0.1, jnp.float32)   # PReLU init=0.1 per channel
            stride = 2 if d == 0 else 1
            layers.append((w, b, alpha, stride))
        params.append(layers)
    return params


def feat_pyramid_forward(params, x_nchw):
    """Mirrors FeatPyramid.forward: returns a list of per-block NCHW outputs."""
    x = jnp.transpose(x_nchw, (0, 2, 3, 1)).astype(jnp.bfloat16)   # NCHW -> NHWC bf16
    outs = []
    nb = len(params)
    for bi, block in enumerate(params):
        nl = len(block)
        for li, (w, b, alpha, stride) in enumerate(block):
            last = (li == nl - 1)
            if last:
                y = conv3x3_prelu(x, w, b, alpha, stride, out_layout="nchw")
                outs.append(y)                                      # (N, C, H, W) f32
                if bi < nb - 1:
                    x = jnp.transpose(y, (0, 2, 3, 1)).astype(jnp.bfloat16)
            else:
                x = conv3x3_prelu(x, w, b, alpha, stride, out_layout="nhwc")
    return outs


def _reference_forward_f32(params, x_nchw):
    """Pure f32 reference (lax conv) -- semantics of the original module."""
    x = x_nchw
    outs = []
    for block in params:
        for (w, b, alpha, stride) in block:
            wk = jnp.transpose(w, (3, 2, 0, 1))                     # -> OIHW
            y = jax.lax.conv_general_dilated(
                x, wk, (stride, stride), ((1, 1), (1, 1)),
                dimension_numbers=("NCHW", "OIHW", "NCHW"))
            y = y + b[None, :, None, None]
            x = jnp.where(y > 0, y, alpha[None, :, None, None] * y)
        outs.append(x)
    return outs


def _reference_forward_bf16(params, x_nchw):
    """Numerics-matched reference: bf16 operands, f32 accumulation, f32 epilogue,
    bf16 inter-layer activations, f32 block outputs (same rounding as the kernel)."""
    x = x_nchw.astype(jnp.bfloat16)
    outs = []
    for block in params:
        nl = len(block)
        for li, (w, b, alpha, stride) in enumerate(block):
            wk = jnp.transpose(w, (3, 2, 0, 1)).astype(jnp.bfloat16)
            y = jax.lax.conv_general_dilated(
                x, wk, (stride, stride), ((1, 1), (1, 1)),
                dimension_numbers=("NCHW", "OIHW", "NCHW"),
                preferred_element_type=jnp.float32)
            y = y + b[None, :, None, None]
            y = jnp.where(y > 0, y, alpha[None, :, None, None] * y)
            if li == nl - 1:
                outs.append(y)
            x = y.astype(jnp.bfloat16)
    return outs


if __name__ == "__main__":
    key = jax.random.PRNGKey(0)
    key, kx = jax.random.split(key)
    x = jax.random.normal(kx, (2, 3, 16, 16), jnp.float32)   # NCHW like PyTorch

    params = init_feat_pyramid(jax.random.PRNGKey(0))

    outs = feat_pyramid_forward(params, x)
    outs = [jax.block_until_ready(o) for o in outs]

    refs_exact = _reference_forward_bf16(params, x)   # same bf16/f32 numerics
    refs_f32 = _reference_forward_f32(params, x)      # original f32 module semantics
    for o, r, rf in zip(outs, refs_exact, refs_f32):
        assert o.shape == r.shape, (o.shape, r.shape)
        assert jnp.allclose(o, r, atol=1e-4, rtol=1e-4), \
            "mismatch vs bf16-consistent reference"
        assert jnp.allclose(o, rf, atol=1e-1, rtol=1e-1), \
            "mismatch vs f32 reference"

    print("KERNEL_OK")
</pallas_src>

<mosaic_0001>
module attributes {stable_mosaic.version = 11 : i64} {
  func.func @kernel(%arg0: i32, %arg1: memref<4x9x9x3xbf16, #tpu.memory_space<vmem>>, %arg2: memref<9x3x16xbf16, #tpu.memory_space<vmem>>, %arg3: memref<1x16xf32, #tpu.memory_space<vmem>>, %arg4: memref<1x16xf32, #tpu.memory_space<vmem>>, %arg5: memref<1x8x8x16xbf16, #tpu.memory_space<vmem>>) attributes {dimension_semantics = [#tpu.dimension_semantics<parallel>], iteration_bounds = array<i64: 2>, scalar_prefetch = 0 : i64, scratch_operands = 0 : i64, tpu.core_type = #tpu.core_type<tc>, window_params = [{transform_indices = @transform_0, window_bounds = array<i64: 4, 9, 9, 3>}, {pipeline_mode = #tpu.pipeline_mode<synchronous>, transform_indices = @transform_1, window_bounds = array<i64: 9, 3, 16>}, {pipeline_mode = #tpu.pipeline_mode<synchronous>, transform_indices = @transform_2, window_bounds = array<i64: 1, 16>}, {pipeline_mode = #tpu.pipeline_mode<synchronous>, transform_indices = @transform_3, window_bounds = array<i64: 1, 16>}, {transform_indices = @transform_4, window_bounds = array<i64: 1, 8, 8, 16>}]} {
    %cst = arith.constant 0.000000e+00 : f32
    %0 = vector.broadcast %cst : f32 to vector<64x16xf32>
    %c0 = arith.constant 0 : index
    %c0_0 = arith.constant 0 : index
    %c0_1 = arith.constant 0 : index
    %c0_2 = arith.constant 0 : index
    %1 = vector.load %arg1[%c0, %c0_0, %c0_1, %c0_2] : memref<4x9x9x3xbf16, #tpu.memory_space<vmem>>, vector<1x8x8x3xbf16>
    %2 = vector.shape_cast %1 : vector<1x8x8x3xbf16> to vector<8x8x3xbf16>
    %3 = vector.shape_cast %2 : vector<8x8x3xbf16> to vector<64x3xbf16>
    %c0_3 = arith.constant 0 : index
    %c0_4 = arith.constant 0 : index
    %c0_5 = arith.constant 0 : index
    %4 = vector.load %arg2[%c0_3, %c0_4, %c0_5] : memref<9x3x16xbf16, #tpu.memory_space<vmem>>, vector<1x3x16xbf16>
    %5 = vector.shape_cast %4 : vector<1x3x16xbf16> to vector<3x16xbf16>
    %cst_6 = arith.constant dense<0.000000e+00> : vector<64x16xf32>
    %6 = tpu.matmul %3, %5, %cst_6 {dimension_numbers = #tpu.dot_dimension_numbers<[1], [0], [0], [1], [0, 0, 1, 1], [], []>} : vector<64x3xbf16>, vector<3x16xbf16>, vector<64x16xf32> -> vector<64x16xf32>
    %7 = arith.addf %0, %6 : vector<64x16xf32>
    %c1 = arith.constant 1 : index
    %c0_7 = arith.constant 0 : index
    %c0_8 = arith.constant 0 : index
    %c0_9 = arith.constant 0 : index
    %8 = vector.load %arg1[%c1, %c0_7, %c0_8, %c0_9] : memref<4x9x9x3xbf16, #tpu.memory_space<vmem>>, vector<1x8x8x3xbf16>
    %9 = vector.shape_cast %8 : vector<1x8x8x3xbf16> to vector<8x8x3xbf16>
    %10 = vector.shape_cast %9 : vector<8x8x3xbf16> to vector<64x3xbf16>
    %c1_10 = arith.constant 1 : index
    %c0_11 = arith.constant 0 : index
    %c0_12 = arith.constant 0 : index
    %11 = vector.load %arg2[%c1_10, %c0_11, %c0_12] : memref<9x3x16xbf16, #tpu.memory_space<vmem>>, vector<1x3x16xbf16>
    %12 = vector.shape_cast %11 : vector<1x3x16xbf16> to vector<3x16xbf16>
    %cst_13 = arith.constant dense<0.000000e+00> : vector<64x16xf32>
    %13 = tpu.matmul %10, %12, %cst_13 {dimension_numbers = #tpu.dot_dimension_numbers<[1], [0], [0], [1], [0, 0, 1, 1], [], []>} : vector<64x3xbf16>, vector<3x16xbf16>, vector<64x16xf32> -> vector<64x16xf32>
    %14 = arith.addf %7, %13 : vector<64x16xf32>
    %c0_14 = arith.constant 0 : index
    %c0_15 = arith.constant 0 : index
    %c1_16 = arith.constant 1 : index
    %c0_17 = arith.constant 0 : index
    %15 = vector.load %arg1[%c0_14, %c0_15, %c1_16, %c0_17] : memref<4x9x9x3xbf16, #tpu.memory_space<vmem>>, vector<1x8x8x3xbf16>
    %16 = vector.shape_cast %15 : vector<1x8x8x3xbf16> to vector<8x8x3xbf16>
    %17 = vector.shape_cast %16 : vector<8x8x3xbf16> to vector<64x3xbf16>
    %c2 = arith.constant 2 : index
    %c0_18 = arith.constant 0 : index
    %c0_19 = arith.constant 0 : index
    %18 = vector.load %arg2[%c2, %c0_18, %c0_19] : memref<9x3x16xbf16, #tpu.memory_space<vmem>>, vector<1x3x16xbf16>
    %19 = vector.shape_cast %18 : vector<1x3x16xbf16> to vector<3x16xbf16>
    %cst_20 = arith.constant dense<0.000000e+00> : vector<64x16xf32>
    %20 = tpu.matmul %17, %19, %cst_20 {dimension_numbers = #tpu.dot_dimension_numbers<[1], [0], [0], [1], [0, 0, 1, 1], [], []>} : vector<64x3xbf16>, vector<3x16xbf16>, vector<64x16xf32> -> vector<64x16xf32>
    %21 = arith.addf %14, %20 : vector<64x16xf32>
    %c2_21 = arith.constant 2 : index
    %c0_22 = arith.constant 0 : index
    %c0_23 = arith.constant 0 : index
    %c0_24 = arith.constant 0 : index
    %22 = vector.load %arg1[%c2_21, %c0_22, %c0_23, %c0_24] : memref<4x9x9x3xbf16, #tpu.memory_space<vmem>>, vector<1x8x8x3xbf16>
    %23 = vector.shape_cast %22 : vector<1x8x8x3xbf16> to vector<8x8x3xbf16>
    %24 = vector.shape_cast %23 : vector<8x8x3xbf16> to vector<64x3xbf16>
    %c3 = arith.constant 3 : index
    %c0_25 = arith.constant 0 : index
    %c0_26 = arith.constant 0 : index
    %25 = vector.load %arg2[%c3, %c0_25, %c0_26] : memref<9x3x16xbf16, #tpu.memory_space<vmem>>, vector<1x3x16xbf16>
    %26 = vector.shape_cast %25 : vector<1x3x16xbf16> to vector<3x16xbf16>
    %cst_27 = arith.constant dense<0.000000e+00> : vector<64x16xf32>
    %27 = tpu.matmul %24, %26, %cst_27 {dimension_numbers = #tpu.dot_dimension_numbers<[1], [0], [0], [1], [0, 0, 1, 1], [], []>} : vector<64x3xbf16>, vector<3x16xbf16>, vector<64x16xf32> -> vector<64x16xf32>
    %28 = arith.addf %21, %27 : vector<64x16xf32>
    %c3_28 = arith.constant 3 : index
    %c0_29 = arith.constant 0 : index
    %c0_30 = arith.constant 0 : index
    %c0_31 = arith.constant 0 : index
    %29 = vector.load %arg1[%c3_28, %c0_29, %c0_30, %c0_31] : memref<4x9x9x3xbf16, #tpu.memory_space<vmem>>, vector<1x8x8x3xbf16>
    %30 = vector.shape_cast %29 : vector<1x8x8x3xbf16> to vector<8x8x3xbf16>
    %31 = vector.shape_cast %30 : vector<8x8x3xbf16> to vector<64x3xbf16>
    %c4 = arith.constant 4 : index
    %c0_32 = arith.constant 0 : index
    %c0_33 = arith.constant 0 : index
    %32 = vector.load %arg2[%c4, %c0_32, %c0_33] : memref<9x3x16xbf16, #tpu.memory_space<vmem>>, vector<1x3x16xbf16>
    %33 = vector.shape_cast %32 : vector<1x3x16xbf16> to vector<3x16xbf16>
    %cst_34 = arith.constant dense<0.000000e+00> : vector<64x16xf32>
    %34 = tpu.matmul %31, %33, %cst_34 {dimension_numbers = #tpu.dot_dimension_numbers<[1], [0], [0], [1], [0, 0, 1, 1], [], []>} : vector<64x3xbf16>, vector<3x16xbf16>, vector<64x16xf32> -> vector<64x16xf32>
    %35 = arith.addf %28, %34 : vector<64x16xf32>
    %c2_35 = arith.constant 2 : index
    %c0_36 = arith.constant 0 : index
    %c1_37 = arith.constant 1 : index
    %c0_38 = arith.constant 0 : index
    %36 = vector.load %arg1[%c2_35, %c0_36, %c1_37, %c0_38] : memref<4x9x9x3xbf16, #tpu.memory_space<vmem>>, vector<1x8x8x3xbf16>
    %37 = vector.shape_cast %36 : vector<1x8x8x3xbf16> to vector<8x8x3xbf16>
    %38 = vector.shape_cast %37 : vector<8x8x3xbf16> to vector<64x3xbf16>
    %c5 = arith.constant 5 : index
    %c0_39 = arith.constant 0 : index
    %c0_40 = arith.constant 0 : index
    %39 = vector.load %arg2[%c5, %c0_39, %c0_40] : memref<9x3x16xbf16, #tpu.memory_space<vmem>>, vector<1x3x16xbf16>
    %40 = vector.shape_cast %39 : vector<1x3x16xbf16> to vector<3x16xbf16>
    %cst_41 = arith.constant dense<0.000000e+00> : vector<64x16xf32>
    %41 = tpu.matmul %38, %40, %cst_41 {dimension_numbers = #tpu.dot_dimension_numbers<[1], [0], [0], [1], [0, 0, 1, 1], [], []>} : vector<64x3xbf16>, vector<3x16xbf16>, vector<64x16xf32> -> vector<64x16xf32>
    %42 = arith.addf %35, %41 : vector<64x16xf32>
    %c0_42 = arith.constant 0 : index
    %c1_43 = arith.constant 1 : index
    %c0_44 = arith.constant 0 : index
    %c0_45 = arith.constant 0 : index
    %43 = vector.load %arg1[%c0_42, %c1_43, %c0_44, %c0_45] : memref<4x9x9x3xbf16, #tpu.memory_space<vmem>>, vector<1x8x8x3xbf16>
    %44 = vector.shape_cast %43 : vector<1x8x8x3xbf16> to vector<8x8x3xbf16>
    %45 = vector.shape_cast %44 : vector<8x8x3xbf16> to vector<64x3xbf16>
    %c6 = arith.constant 6 : index
    %c0_46 = arith.constant 0 : index
    %c0_47 = arith.constant 0 : index
    %46 = vector.load %arg2[%c6, %c0_46, %c0_47] : memref<9x3x16xbf16, #tpu.memory_space<vmem>>, vector<1x3x16xbf16>
    %47 = vector.shape_cast %46 : vector<1x3x16xbf16> to vector<3x16xbf16>
    %cst_48 = arith.constant dense<0.000000e+00> : vector<64x16xf32>
    %48 = tpu.matmul %45, %47, %cst_48 {dimension_numbers = #tpu.dot_dimension_numbers<[1], [0], [0], [1], [0, 0, 1, 1], [], []>} : vector<64x3xbf16>, vector<3x16xbf16>, vector<64x16xf32> -> vector<64x16xf32>
    %49 = arith.addf %42, %48 : vector<64x16xf32>
    %c1_49 = arith.constant 1 : index
    %c1_50 = arith.constant 1 : index
    %c0_51 = arith.constant 0 : index
    %c0_52 = arith.constant 0 : index
    %50 = vector.load %arg1[%c1_49, %c1_50, %c0_51, %c0_52] : memref<4x9x9x3xbf16, #tpu.memory_space<vmem>>, vector<1x8x8x3xbf16>
    %51 = vector.shape_cast %50 : vector<1x8x8x3xbf16> to vector<8x8x3xbf16>
    %52 = vector.shape_cast %51 : vector<8x8x3xbf16> to vector<64x3xbf16>
    %c7 = arith.constant 7 : index
    %c0_53 = arith.constant 0 : index
    %c0_54 = arith.constant 0 : index
    %53 = vector.load %arg2[%c7, %c0_53, %c0_54] : memref<9x3x16xbf16, #tpu.memory_space<vmem>>, vector<1x3x16xbf16>
    %54 = vector.shape_cast %53 : vector<1x3x16xbf16> to vector<3x16xbf16>
    %cst_55 = arith.constant dense<0.000000e+00> : vector<64x16xf32>
    %55 = tpu.matmul %52, %54, %cst_55 {dimension_numbers = #tpu.dot_dimension_numbers<[1], [0], [0], [1], [0, 0, 1, 1], [], []>} : vector<64x3xbf16>, vector<3x16xbf16>, vector<64x16xf32> -> vector<64x16xf32>
    %56 = arith.addf %49, %55 : vector<64x16xf32>
    %c0_56 = arith.constant 0 : index
    %c1_57 = arith.constant 1 : index
    %c1_58 = arith.constant 1 : index
    %c0_59 = arith.constant 0 : index
    %57 = vector.load %arg1[%c0_56, %c1_57, %c1_58, %c0_59] : memref<4x9x9x3xbf16, #tpu.memory_space<vmem>>, vector<1x8x8x3xbf16>
    %58 = vector.shape_cast %57 : vector<1x8x8x3xbf16> to vector<8x8x3xbf16>
    %59 = vector.shape_cast %58 : vector<8x8x3xbf16> to vector<64x3xbf16>
    %c8 = arith.constant 8 : index
    %c0_60 = arith.constant 0 : index
    %c0_61 = arith.constant 0 : index
    %60 = vector.load %arg2[%c8, %c0_60, %c0_61] : memref<9x3x16xbf16, #tpu.memory_space<vmem>>, vector<1x3x16xbf16>
    %61 = vector.shape_cast %60 : vector<1x3x16xbf16> to vector<3x16xbf16>
    %cst_62 = arith.constant dense<0.000000e+00> : vector<64x16xf32>
    %62 = tpu.matmul %59, %61, %cst_62 {dimension_numbers = #tpu.dot_dimension_numbers<[1], [0], [0], [1], [0, 0, 1, 1], [], []>} : vector<64x3xbf16>, vector<3x16xbf16>, vector<64x16xf32> -> vector<64x16xf32>
    %63 = arith.addf %56, %62 : vector<64x16xf32>
    %c0_63 = arith.constant 0 : index
    %c0_64 = arith.constant 0 : index
    %64 = vector.load %arg3[%c0_63, %c0_64] : memref<1x16xf32, #tpu.memory_space<vmem>>, vector<1x16xf32>
    %65 = vector.broadcast %64 : vector<1x16xf32> to vector<64x16xf32>
    %66 = arith.addf %63, %65 : vector<64x16xf32>
    %c0_65 = arith.constant 0 : index
    %c0_66 = arith.constant 0 : index
    %67 = vector.load %arg4[%c0_65, %c0_66] : memref<1x16xf32, #tpu.memory_space<vmem>>, vector<1x16xf32>
    %cst_67 = arith.constant 0.000000e+00 : f32
    %68 = vector.broadcast %cst_67 : f32 to vector<64x16xf32>
    %69 = arith.cmpf ogt, %66, %68 : vector<64x16xf32>
    %70 = vector.broadcast %67 : vector<1x16xf32> to vector<64x16xf32>
    %71 = arith.mulf %70, %66 : vector<64x16xf32>
    %72 = arith.select %69, %66, %71 : vector<64x16xi1>, vector<64x16xf32>
    %73 = vector.shape_cast %72 : vector<64x16xf32> to vector<1x8x8x16xf32>
    %74 = arith.truncf %73 : vector<1x8x8x16xf32> to vector<1x8x8x16xbf16>
    %c0_68 = arith.constant 0 : index
    %c0_69 = arith.constant 0 : index
    %c0_70 = arith.constant 0 : index
    %c0_71 = arith.constant 0 : index
    %75 = vector.load %arg5[%c0_68, %c0_69, %c0_70, %c0_71] : memref<1x8x8x16xbf16, #tpu.memory_space<vmem>>, vector<1x8x8x16xbf16>
    tpu.vector_store %arg5[%c0_68, %c0_69, %c0_70, %c0_71], %74 {strides = array<i32>} : memref<1x8x8x16xbf16, #tpu.memory_space<vmem>>, vector<1x8x8x16xbf16>,
    return
  }
  func.func @transform_0(%arg0: i32) -> (i32, i32, i32, i32) {
    %c0_i32 = arith.constant 0 : i32
    %c0_i32_0 = arith.constant 0 : i32
    %c0_i32_1 = arith.constant 0 : i32
    %c0_i32_2 = arith.constant 0 : i32
    return %arg0, %c0_i32, %c0_i32_0, %c0_i32_1 : i32, i32, i32, i32
  }
  func.func @transform_1(%arg0: i32) -> (i32, i32, i32) {
    %c0_i32 = arith.constant 0 : i32
    %c0_i32_0 = arith.constant 0 : i32
    %c0_i32_1 = arith.constant 0 : i32
    %c0_i32_2 = arith.constant 0 : i32
    return %c0_i32, %c0_i32_0, %c0_i32_1 : i32, i32, i32
  }
  func.func @transform_2(%arg0: i32) -> (i32, i32) {
    %c0_i32 = arith.constant 0 : i32
    %c0_i32_0 = arith.constant 0 : i32
    %c0_i32_1 = arith.constant 0 : i32
    return %c0_i32, %c0_i32_0 : i32, i32
  }
  func.func @transform_3(%arg0: i32) -> (i32, i32) {
    %c0_i32 = arith.constant 0 : i32
    %c0_i32_0 = arith.constant 0 : i32
    %c0_i32_1 = arith.constant 0 : i32
    return %c0_i32, %c0_i32_0 : i32, i32
  }
  func.func @transform_4(%arg0: i32) -> (i32, i32, i32, i32) {
    %c0_i32 = arith.constant 0 : i32
    %c0_i32_0 = arith.constant 0 : i32
    %c0_i32_1 = arith.constant 0 : i32
    %c0_i32_2 = arith.constant 0 : i32
    return %arg0, %c0_i32, %c0_i32_0, %c0_i32_1 : i32, i32, i32, i32
  }
}

</mosaic_0001>

<llo_original>
// kernel: tpu_custom_call.1
$region0: #{tpu_custom_call.1}
  #allocation0 [shape = 'u32[]', space=smem, size = 0x4, offset = 0x4, fixed_abs, tag = 'smem constant byte address 0x4 - core index']
  #allocation1 [shape = 'u32[144,128]{1,0:T(1,128)}', space=vmem, size = 0x12000, scoped, tag = 'internal scratch']
  %s0 = inlined_call_operand.vmem [shape: bf16[8,9,9,3], index: 0, kind: input, shape index: {}]
  %s1 = inlined_call_operand.vmem [shape: bf16[9,3,16], index: 1, kind: input, shape index: {}]
  %s2 = inlined_call_operand.vmem [shape: f32[1,16], index: 2, kind: input, shape index: {}]
  %s3 = inlined_call_operand.vmem [shape: f32[1,16], index: 3, kind: input, shape index: {}]
  %s4 = inlined_call_operand.hbm [shape: bf16[2,8,8,16], index: 4, kind: output, shape index: {}]
  %s5 = sld [smem:[#allocation0]]
  $region49: #{tpu_custom_call.1} parent=0
    _
  %s7 = ssub.s32 1, %s5
  %s8 = scalar_select 0, %s7, %s5
  $region1: #{tpu_custom_call.1} parent=0
    #allocation2 [shape = 'u8[32768]{0}', space=vmem, size = 0x8000, scoped, tag = 'output window, operand 0']
    #allocation3 [shape = 's32[2]{0}', space=sflag, size = 0x8, scoped, tag = 'scoped memory for tpu_custom_call.1']
    %9 = vsyncpa [#allocation3], 0
    %s10 = scalar_lea.sflag [#allocation3], 1
    %11 = vsyncpa %s10, 0
    loop: start=0, step=1, limit=4
    $region2: #{tpu_custom_call.1} parent=1 // loop_pre_header
      _
    $region3: #{tpu_custom_call.1} parent=1 // loop_header
      %s13 = sphi 0, %s17
      %p14 = scmp.ge.s32.totalorder %s13, 4
      %s23 = sphi 0, %s25
      %s26 = sphi 0, %s23
      %s27 = sphi 0, %s26
      %s43 = sphi 0, %s27
      %s47 = sphi 0, %s47
      %s49 = sphi 0, %s47
      %s50 = sphi 0, %s49
      %s64 = sphi 0, %s50
      %s68 = sphi 0, %s68
      %s70 = sphi 0, %s68
      %s71 = sphi 0, %s70
      %s85 = sphi 0, %s71
      %s89 = sphi 0, %s89
      %s91 = sphi 0, %s89
      %s92 = sphi 0, %s91
      %s106 = sphi 0, %s92
      %s112 = sphi 0, %s114
      %s115 = sphi 0, %s112
      %s116 = sphi 0, %s115
      %s132 = sphi 0, %s116
    $region4: #{tpu_custom_call.1} parent=1 // loop_header_branch
      %16 = sbr.rel (%p14) target = $region8
    $region5: #{tpu_custom_call.1} parent=1 // loop_body
      %s18 = ssub.s32 %s13, 1
      %s19 = ssub.s32 %s13, 2
      %s20 = sadd.s32 %s13, 1
      %s21 = ssub.s32 %s13, %s20
      %p22 = scmp.eq.s32.totalorder %s21, 0
      %s24 = sadd.s32 %s23, 1
      %s25 = scalar_select %p22, %s23, %s24
      %p28 = pneg %p22
      %p29 = scmp.eq.s32.totalorder %s13, 1
      %p30 = por %p28, %p29
      %p31 = scmp.ne.s32.totalorder %s23, %s26
      %p32 = scmp.eq.s32.totalorder %s13, 0
      %p33 = por %p31, %p32
      %p34 = scmp.ne.s32.totalorder %s23, %s26
      %p35 = scmp.eq.s32.totalorder %s18, 1
      %p36 = por %p34, %p35
      %p37 = scmp.ne.s32.totalorder %s26, %s27
      %p38 = scmp.eq.s32.totalorder %s18, 0
      %p39 = por %p37, %p38
      %p40 = scmp.ne.s32.totalorder %s26, %s27
      %p41 = scmp.eq.s32.totalorder %s19, 1
      %p42 = por %p40, %p41
      %p44 = scmp.ne.s32.totalorder %s27, %s43
      %p45 = scmp.eq.s32.totalorder %s19, 0
      %p46 = por %p44, %p45
      %s48 = sadd.s32 %s47, 1
      %p51 = scmp.eq.s32.totalorder %s13, 1
      %p52 = scmp.ne.s32.totalorder %s47, %s49
      %p53 = scmp.eq.s32.totalorder %s13, 0
      %p54 = por %p52, %p53
      %p55 = scmp.ne.s32.totalorder %s47, %s49
      %p56 = scmp.eq.s32.totalorder %s18, 1
      %p57 = por %p55, %p56
      %p58 = scmp.ne.s32.totalorder %s49, %s50
      %p59 = scmp.eq.s32.totalorder %s18, 0
      %p60 = por %p58, %p59
      %p61 = scmp.ne.s32.totalorder %s49, %s50
      %p62 = scmp.eq.s32.totalorder %s19, 1
      %p63 = por %p61, %p62
      %p65 = scmp.ne.s32.totalorder %s50, %s64
      %p66 = scmp.eq.s32.totalorder %s19, 0
      %p67 = por %p65, %p66
      %s69 = sadd.s32 %s68, 1
      %p72 = scmp.eq.s32.totalorder %s13, 1
      %p73 = scmp.ne.s32.totalorder %s68, %s70
      %p74 = scmp.eq.s32.totalorder %s13, 0
      %p75 = por %p73, %p74
      %p76 = scmp.ne.s32.totalorder %s68, %s70
      %p77 = scmp.eq.s32.totalorder %s18, 1
      %p78 = por %p76, %p77
      %p79 = scmp.ne.s32.totalorder %s70, %s71
      %p80 = scmp.eq.s32.totalorder %s18, 0
      %p81 = por %p79, %p80
      %p82 = scmp.ne.s32.totalorder %s70, %s71
      %p83 = scmp.eq.s32.totalorder %s19, 1
      %p84 = por %p82, %p83
      %p86 = scmp.ne.s32.totalorder %s71, %s85
      %p87 = scmp.eq.s32.totalorder %s19, 0
      %p88 = por %p86, %p87
      %s90 = sadd.s32 %s89, 1
      %p93 = scmp.eq.s32.totalorder %s13, 1
      %p94 = scmp.ne.s32.totalorder %s89, %s91
      %p95 = scmp.eq.s32.totalorder %s13, 0
      %p96 = por %p94, %p95
      %p97 = scmp.ne.s32.totalorder %s89, %s91
      %p98 = scmp.eq.s32.totalorder %s18, 1
      %p99 = por %p97, %p98
      %p100 = scmp.ne.s32.totalorder %s91, %s92
      %p101 = scmp.eq.s32.totalorder %s18, 0
      %p102 = por %p100, %p101
      %p103 = scmp.ne.s32.totalorder %s91, %s92
      %p104 = scmp.eq.s32.totalorder %s19, 1
      %p105 = por %p103, %p104
      %p107 = scmp.ne.s32.totalorder %s92, %s106
      %p108 = scmp.eq.s32.totalorder %s19, 0
      %p109 = por %p107, %p108
      %s110 = ssub.s32 %s13, %s20
      %p111 = scmp.eq.s32.totalorder %s110, 0
      %s113 = sadd.s32 %s112, 1
      %s114 = scalar_select %p111, %s112, %s113
      %p117 = pneg %p111
      %p118 = scmp.eq.s32.totalorder %s13, 1
      %p119 = por %p117, %p118
      %p120 = scmp.ne.s32.totalorder %s112, %s115
      %p121 = scmp.eq.s32.totalorder %s13, 0
      %p122 = por %p120, %p121
      %p123 = scmp.ne.s32.totalorder %s112, %s115
      %p124 = scmp.eq.s32.totalorder %s18, 1
      %p125 = por %p123, %p124
      %p126 = scmp.ne.s32.totalorder %s115, %s116
      %p127 = scmp.eq.s32.totalorder %s18, 0
      %p128 = por %p126, %p127
      %p129 = scmp.ne.s32.totalorder %s115, %s116
      %p130 = scmp.eq.s32.totalorder %s19, 1
      %p131 = por %p129, %p130
      %p133 = scmp.ne.s32.totalorder %s116, %s132
      %p134 = scmp.eq.s32.totalorder %s19, 0
      %p135 = por %p133, %p134
      %p136 = scmp.le.s32.totalorder 1, %s13
      %p137 = scmp.lt.s32.totalorder %s13, 3
      %p138 = pnand %p136, %p137
      %p139 = pneg %p138
      // Predicated region
      $region9: #{tpu_custom_call.1} parent=5 // pred_check
        _
      $region10: #{tpu_custom_call.1} parent=5 // pred_check_branch
        %141 = sbr.rel (%p138) target = $region12
      $region11: #{tpu_custom_call.1} parent=5 // pred_region
        %s142 = ssub.s32 %s13, 1
        // Predicated region
        $region13: #{tpu_custom_call.1} parent=11 // pred_check
          %p143 = pneg %p60
        $region14: #{tpu_custom_call.1} parent=11 // pred_check_branch
          %145 = sbr.rel (%p143) target = $region16
        $region15: #{tpu_custom_call.1} parent=11 // pred_region
          _
        $region16: #{tpu_custom_call.1} parent=11 // pred_fallthru
          _
        // Predicated region
        $region17: #{tpu_custom_call.1} parent=11 // pred_check
          %p146 = pneg %p81
        $region18: #{tpu_custom_call.1} parent=11 // pred_check_branch
          %148 = sbr.rel (%p146) target = $region20
        $region19: #{tpu_custom_call.1} parent=11 // pred_region
          _
        $region20: #{tpu_custom_call.1} parent=11 // pred_fallthru
          _
        // Predicated region
        $region21: #{tpu_custom_call.1} parent=11 // pred_check
          %p149 = pneg %p102
        $region22: #{tpu_custom_call.1} parent=11 // pred_check_branch
          %151 = sbr.rel (%p149) target = $region24
        $region23: #{tpu_custom_call.1} parent=11 // pred_region
          _
        $region24: #{tpu_custom_call.1} parent=11 // pred_fallthru
          _
      $region12: #{tpu_custom_call.1} parent=5 // pred_fallthru
        _
      %p152 = scmp.lt.s32.totalorder %s13, 2
      // Predicated region
      $region25: #{tpu_custom_call.1} parent=5 // pred_check
        %p153 = pneg %p152
      $region26: #{tpu_custom_call.1} parent=5 // pred_check_branch
        %155 = sbr.rel (%p153) target = $region28
      $region27: #{tpu_custom_call.1} parent=5 // pred_region
        // Predicated region
        $region29: #{tpu_custom_call.1} parent=27 // pred_check
          %p156 = pneg %p33
        $region30: #{tpu_custom_call.1} parent=27 // pred_check_branch
          %158 = sbr.rel (%p156) target = $region32
        $region31: #{tpu_custom_call.1} parent=27 // pred_region
          %s159 = smul.u32 4, %s13
          %p160 = scmp.lt.s32.totalorder %s159, 7
          %s161 = scalar_select %p160, %s159, 7
          %s162 = smul.addr %s161, 18
          %s163 = smul.addr %s162, 4
          %s164 = scalar_lea.vmem %s0, %s163
          %s165 = smul.u32 4, %s13
        $region32: #{tpu_custom_call.1} parent=27 // pred_fallthru
          _
      $region28: #{tpu_custom_call.1} parent=5 // pred_fallthru
        _
      %p166 = scmp.le.s32.totalorder 1, %s13
      %p167 = scmp.lt.s32.totalorder %s13, 3
      %p168 = pnand %p166, %p167
      %p169 = pneg %p168
      // Predicated region
      $region33: #{tpu_custom_call.1} parent=5 // pred_check
        _
      $region34: #{tpu_custom_call.1} parent=5 // pred_check_branch
        %171 = sbr.rel (%p168) target = $region36
      $region35: #{tpu_custom_call.1} parent=5 // pred_region
        %s172 = ssub.s32 %s13, 1
        %s173 = smul.u32 4, %s18
        %p174 = scmp.lt.s32.totalorder %s173, 7
        %s175 = scalar_select %p174, %s173, 7
        %s176 = smul.addr %s175, 18
        %s177 = smul.addr %s176, 4
        %s178 = scalar_lea.vmem %s0, %s177
        %p179 = pneg %p39
        %p180 = pneg %p36
        %p181 = pneg %p60
        %p182 = pneg %p57
        %p183 = pneg %p81
        %p184 = pneg %p78
        %p185 = pneg %p102
        %p186 = pneg %p99
        %p187 = pneg %p128
        %p188 = pneg %p125
        %s189 = sand.u32 %s115, 1
        %s190 = scalar_lea.sflag [#allocation3], %s189
        %s191 = sand.u32 %s115, 1
        %s192 = smul.addr %s191, 32
        %s193 = scalar_lea.vmem [#allocation2], %s192
        %s194 = smul.u32 4, %s18
        %p195 = scmp.lt.s32.totalorder %s194, 7
        %s196 = scalar_select %p195, %s194, 7
        %s197 = smul.addr %s196, 18
        %s198 = smul.addr %s197, 4
        %s199 = scalar_lea.vmem %s0, %s198
        %s200 = smul.u32 4, %s18
        %v202 = vld [vmem:[%s199] sm:$0xf]
        %v203 = vld [vmem:[%s199 + $0x8] sm:$0xf]
        %v204 = vld [vmem:[%s199 + $0x10] sm:$0xf]
        %v205 = vld [vmem:[%s199 + $0x18] sm:$0xf]
        %v206 = vld [vmem:[%s199 + $0x20] sm:$0xf]
        %v207 = vld [vmem:[%s199 + $0x28] sm:$0xf]
        %v208 = vld [vmem:[%s199 + $0x30] sm:$0xf]
        %v209 = vld [vmem:[%s199 + $0x38] sm:$0xf]
        %v210 = vld [vmem:[%s1] sm:$0x3]
        %s211 = scalar_lea.vmem %s199, 72
        %v212 = vld [vmem:[%s211] sm:$0xf]
        %v213 = vld [vmem:[%s211 + $0x8] sm:$0xf]
        %v214 = vld [vmem:[%s211 + $0x10] sm:$0xf]
        %v215 = vld [vmem:[%s211 + $0x18] sm:$0xf]
        %v216 = vld [vmem:[%s211 + $0x20] sm:$0xf]
        %v217 = vld [vmem:[%s211 + $0x28] sm:$0xf]
        %v218 = vld [vmem:[%s211 + $0x30] sm:$0xf]
        %v219 = vld [vmem:[%s211 + $0x38] sm:$0xf]
        %s220 = scalar_lea.vmem %s1, 2
        %v221 = vld [vmem:[%s220] sm:$0x3]
        %v230 = vunpack.c.l.b16 %v212
        %v231 = vunpack.c.l.b16 %v213
        %v232 = vunpack.c.l.b16 %v214
        %v233 = vunpack.c.l.b16 %v215
        %v234 = vunpack.c.l.b16 %v216
        %v235 = vunpack.c.l.b16 %v217
        %v236 = vunpack.c.l.b16 %v218
        %v237 = vunpack.c.l.b16 %v219
        %v238 = vpack.c.b16 %v231, %v230
        %v239 = vpack.c.b16 %v233, %v232
        %v240 = vpack.c.b16 %v235, %v234
        %v241 = vpack.c.b16 %v237, %v236
        %vm242 = vcmask 23552
        %v244 = vsel %vm242, %v238, 0
        %v247 = vsel %vm242, %v239, 0
        %v250 = vsel %vm242, %v240, 0
        %v253 = vsel %vm242, %v241, 0
        %vm255 = vcmask 1040384
        %vm256 = vcmask 1041408
        %v257 = vsel %vm255, 4294967295, 65535
        %v258 = vsel %vm256, %v257, 0
        %v260 = vand.u32 %v221, %v258
        %262 = vmatprep.subr.bf16.mxu0 0
        %263 = vmatpush1.bf16.msra.mxu0 0
        %264 = vmatprep.subr.bf16.mxu0 0
        %265 = vmatpush1.bf16.msra.mxu0 0
        %266 = vmatprep.subr.bf16.mxu0 0
        %267 = vmatpush1.bf16.msra.mxu0 0
        %268 = vmatprep.subr.bf16.mxu0 0
        %269 = vmatpush1.bf16.msra.mxu0 0
        %270 = vmatprep.subr.bf16.mxu0 0
        %271 = vmatpush1.bf16.msra.mxu0 0
        %272 = vmatprep.subr.bf16.mxu0 0
        %273 = vmatpush1.bf16.msra.mxu0 0
        %274 = vmatprep.subr.bf16.mxu0 0
        %275 = vmatpush1.bf16.msra.mxu0 0
        %276 = vmatprep.subr.bf16.mxu0 0
        %277 = vmatpush1.bf16.msra.mxu0 %v260
        %278 = vmatprep.subr.bf16.mxu0 0
        %279 = vmatpush2.bf16.msra.mxu0 0
        %280 = vmatprep.subr.bf16.mxu0 0
        %281 = vmatpush2.bf16.msra.mxu0 0
        %282 = vmatprep.subr.bf16.mxu0 0
        %283 = vmatpush2.bf16.msra.mxu0 0
        %284 = vmatprep.subr.bf16.mxu0 0
        %285 = vmatpush2.bf16.msra.mxu0 0
        %286 = vmatprep.subr.bf16.mxu0 0
        %287 = vmatpush2.bf16.msra.mxu0 0
        %288 = vmatprep.subr.bf16.mxu0 0
        %289 = vmatpush2.bf16.msra.mxu0 0
        %290 = vmatprep.subr.bf16.mxu0 0
        %291 = vmatpush2.bf16.msra.mxu0 0
        %292 = vmatprep.subr.bf16.mxu0 0
        %293 = vmatpush2.bf16.msra.mxu0 0
        %294 = vmatprep.mubr.bf16.mxu0 0
        %295 = vmatmul.mubr.bf16.gmra.mxu0 %v244
        %v296 = vpop.f32.mrf.mxu0
        %v297 = vadd.f32 0.0, %v296
        %v298 = vpop.f32.mrf.mxu0
        %v299 = vpop.f32.mrf.mxu0
        %v300 = vadd.f32 0.0, %v299
        %v301 = vpop.f32.mrf.mxu0
        %302 = vmatprep.mubr.bf16.mxu0 0
        %303 = vmatmul.mubr.bf16.gmra.mxu0 %v247
        %v304 = vpop.f32.mrf.mxu0
        %v305 = vadd.f32 0.0, %v304
        %v306 = vpop.f32.mrf.mxu0
        %v307 = vpop.f32.mrf.mxu0
        %v308 = vadd.f32 0.0, %v307
        %v309 = vpop.f32.mrf.mxu0
        %310 = vmatprep.mubr.bf16.mxu0 0
        %311 = vmatmul.mubr.bf16.gmra.mxu0 %v250
        %v312 = vpop.f32.mrf.mxu0
        %v313 = vadd.f32 0.0, %v312
        %v314 = vpop.f32.mrf.mxu0
        %v315 = vpop.f32.mrf.mxu0
        %v316 = vadd.f32 0.0, %v315
        %v317 = vpop.f32.mrf.mxu0
        %318 = vmatprep.mubr.bf16.mxu0 0
        %319 = vmatmul.mubr.bf16.gmra.mxu0 %v253
        %v320 = vpop.f32.mrf.mxu0
        %v321 = vadd.f32 0.0, %v320
        %v322 = vpop.f32.mrf.mxu0
        %v323 = vpop.f32.mrf.mxu0
        %v324 = vadd.f32 0.0, %v323
        %v325 = vpop.f32.mrf.mxu0
        %326 = vdwg.mxu0
        %v335 = vunpack.c.l.b16 %v202
        %v336 = vunpack.c.l.b16 %v203
        %v337 = vunpack.c.l.b16 %v204
        %v338 = vunpack.c.l.b16 %v205
        %v339 = vunpack.c.l.b16 %v206
        %v340 = vunpack.c.l.b16 %v207
        %v341 = vunpack.c.l.b16 %v208
        %v342 = vunpack.c.l.b16 %v209
        %v343 = vpack.c.b16 %v336, %v335
        %v344 = vpack.c.b16 %v338, %v337
        %v345 = vpack.c.b16 %v340, %v339
        %v346 = vpack.c.b16 %v342, %v341
        %v348 = vsel %vm242, %v343, 0
        %v351 = vsel %vm242, %v344, 0
        %v354 = vsel %vm242, %v345, 0
        %v357 = vsel %vm242, %v346, 0
        %v360 = vand.u32 %v210, %v258
        %362 = vmatprep.subr.bf16.mxu0 0
        %363 = vmatpush1.bf16.msra.mxu0 0
        %364 = vmatprep.subr.bf16.mxu0 0
        %365 = vmatpush1.bf16.msra.mxu0 0
        %366 = vmatprep.subr.bf16.mxu0 0
        %367 = vmatpush1.bf16.msra.mxu0 0
        %368 = vmatprep.subr.bf16.mxu0 0
        %369 = vmatpush1.bf16.msra.mxu0 0
        %370 = vmatprep.subr.bf16.mxu0 0
        %371 = vmatpush1.bf16.msra.mxu0 0
        %372 = vmatprep.subr.bf16.mxu0 0
        %373 = vmatpush1.bf16.msra.mxu0 0
        %374 = vmatprep.subr.bf16.mxu0 0
        %375 = vmatpush1.bf16.msra.mxu0 0
        %376 = vmatprep.subr.bf16.mxu0 0
        %377 = vmatpush1.bf16.msra.mxu0 %v360
        %378 = vmatprep.subr.bf16.mxu0 0
        %379 = vmatpush2.bf16.msra.mxu0 0
        %380 = vmatprep.subr.bf16.mxu0 0
        %381 = vmatpush2.bf16.msra.mxu0 0
        %382 = vmatprep.subr.bf16.mxu0 0
        %383 = vmatpush2.bf16.msra.mxu0 0
        %384 = vmatprep.subr.bf16.mxu0 0
        %385 = vmatpush2.bf16.msra.mxu0 0
        %386 = vmatprep.subr.bf16.mxu0 0
        %387 = vmatpush2.bf16.msra.mxu0 0
        %388 = vmatprep.subr.bf16.mxu0 0
        %389 = vmatpush2.bf16.msra.mxu0 0
        %390 = vmatprep.subr.bf16.mxu0 0
        %391 = vmatpush2.bf16.msra.mxu0 0
        %392 = vmatprep.subr.bf16.mxu0 0
        %393 = vmatpush2.bf16.msra.mxu0 0
        %394 = vmatprep.mubr.bf16.mxu0 0
        %395 = vmatmul.mubr.bf16.gmra.mxu0 %v348
        %v396 = vpop.f32.mrf.mxu0
        %v397 = vadd.f32 %v297, %v396
        %v398 = vpop.f32.mrf.mxu0
        %v399 = vpop.f32.mrf.mxu0
        %v400 = vadd.f32 %v300, %v399
        %v401 = vpop.f32.mrf.mxu0
        %402 = vmatprep.mubr.bf16.mxu0 0
        %403 = vmatmul.mubr.bf16.gmra.mxu0 %v351
        %v404 = vpop.f32.mrf.mxu0
        %v405 = vadd.f32 %v305, %v404
        %v406 = vpop.f32.mrf.mxu0
        %v407 = vpop.f32.mrf.mxu0
        %v408 = vadd.f32 %v308, %v407
        %v409 = vpop.f32.mrf.mxu0
        %410 = vmatprep.mubr.bf16.mxu0 0
        %411 = vmatmul.mubr.bf16.gmra.mxu0 %v354
        %v412 = vpop.f32.mrf.mxu0
        %v413 = vadd.f32 %v313, %v412
        %v414 = vpop.f32.mrf.mxu0
        %v415 = vpop.f32.mrf.mxu0
        %v416 = vadd.f32 %v316, %v415
        %v417 = vpop.f32.mrf.mxu0
        %418 = vmatprep.mubr.bf16.mxu0 0
        %419 = vmatmul.mubr.bf16.gmra.mxu0 %v357
        %v420 = vpop.f32.mrf.mxu0
        %v421 = vadd.f32 %v321, %v420
        %v422 = vpop.f32.mrf.mxu0
        %v423 = vpop.f32.mrf.mxu0
        %v424 = vadd.f32 %v324, %v423
        %v425 = vpop.f32.mrf.mxu0
        %426 = vdwg.mxu0
        %v427 = vld [vmem:[%s199] sm:$0xf]
        %v428 = vld [vmem:[%s199 + $0x4] sm:$0x1]
        %v429 = vld [vmem:[%s199 + $0x8] sm:$0xf]
        %v430 = vld [vmem:[%s199 + $0xc] sm:$0x1]
        %v431 = vld [vmem:[%s199 + $0x10] sm:$0xf]
        %v432 = vld [vmem:[%s199 + $0x14] sm:$0x1]
        %v433 = vld [vmem:[%s199 + $0x18] sm:$0xf]
        %v434 = vld [vmem:[%s199 + $0x1c] sm:$0x1]
        %v435 = vld [vmem:[%s199 + $0x20] sm:$0xf]
        %v436 = vld [vmem:[%s199 + $0x24] sm:$0x1]
        %v437 = vld [vmem:[%s199 + $0x28] sm:$0xf]
        %v438 = vld [vmem:[%s199 + $0x2c] sm:$0x1]
        %v439 = vld [vmem:[%s199 + $0x30] sm:$0xf]
        %v440 = vld [vmem:[%s199 + $0x34] sm:$0x1]
        %v441 = vld [vmem:[%s199 + $0x38] sm:$0xf]
        %v442 = vld [vmem:[%s199 + $0x3c] sm:$0x1]
        %vm443 = vsmask.f32 3328
        %vm444 = vsmask.f32 7440
        %vm445 = vmor %vm443, %vm444
        %v447 = vshrl.u32 %v427, 16
        %v449 = vrot.slane %v447, 4
        %v450 = vshll.u32 %v427, 16
        %v452 = vrot.slane %v450, 5
        %v453 = vor.u32 %v449, %v452
        %v454 = vrot.slane %v453, 4
        %v456 = vshll.u32 %v428, 16
        %v458 = vrot.slane %v456, 5
        %v459 = vsel %vm445, %v454, %v458
        %v461 = vshrl.u32 %v429, 16
        %v463 = vrot.slane %v461, 4
        %v464 = vshll.u32 %v429, 16
        %v466 = vrot.slane %v464, 5
        %v467 = vor.u32 %v463, %v466
        %v468 = vrot.slane %v467, 4
        %v470 = vshll.u32 %v430, 16
        %v472 = vrot.slane %v470, 5
        %v473 = vsel %vm445, %v468, %v472
        %v475 = vshrl.u32 %v431, 16
        %v477 = vrot.slane %v475, 4
        %v478 = vshll.u32 %v431, 16
        %v480 = vrot.slane %v478, 5
        %v481 = vor.u32 %v477, %v480
        %v482 = vrot.slane %v481, 4
        %v484 = vshll.u32 %v432, 16
        %v486 = vrot.slane %v484, 5
        %v487 = vsel %vm445, %v482, %v486
        %v489 = vshrl.u32 %v433, 16
        %v491 = vrot.slane %v489, 4
        %v492 = vshll.u32 %v433, 16
        %v494 = vrot.slane %v492, 5
        %v495 = vor.u32 %v491, %v494
        %v496 = vrot.slane %v495, 4
        %v498 = vshll.u32 %v434, 16
        %v500 = vrot.slane %v498, 5
        %v501 = vsel %vm445, %v496, %v500
        %v503 = vshrl.u32 %v435, 16
        %v505 = vrot.slane %v503, 4
        %v506 = vshll.u32 %v435, 16
        %v508 = vrot.slane %v506, 5
        %v509 = vor.u32 %v505, %v508
        %v510 = vrot.slane %v509, 4
        %v512 = vshll.u32 %v436, 16
        %v514 = vrot.slane %v512, 5
        %v515 = vsel %vm445, %v510, %v514
        %v517 = vshrl.u32 %v437, 16
        %v519 = vrot.slane %v517, 4
        %v520 = vshll.u32 %v437, 16
        %v522 = vrot.slane %v520, 5
        %v523 = vor.u32 %v519, %v522
        %v524 = vrot.slane %v523, 4
        %v526 = vshll.u32 %v438, 16
        %v528 = vrot.slane %v526, 5
        %v529 = vsel %vm445, %v524, %v528
        %v531 = vshrl.u32 %v439, 16
        %v533 = vrot.slane %v531, 4
        %v534 = vshll.u32 %v439, 16
        %v536 = vrot.slane %v534, 5
        %v537 = vor.u32 %v533, %v536
        %v538 = vrot.slane %v537, 4
        %v540 = vshll.u32 %v440, 16
        %v542 = vrot.slane %v540, 5
        %v543 = vsel %vm445, %v538, %v542
        %v545 = vshrl.u32 %v441, 16
        %v547 = vrot.slane %v545, 4
        %v548 = vshll.u32 %v441, 16
        %v550 = vrot.slane %v548, 5
        %v551 = vor.u32 %v547, %v550
        %v552 = vrot.slane %v551, 4
        %v554 = vshll.u32 %v442, 16
        %v556 = vrot.slane %v554, 5
        %v557 = vsel %vm445, %v552, %v556
        %s558 = scalar_lea.vmem %s1, 4
        %v559 = vld [vmem:[%s558] sm:$0x3]
        %v560 = vunpack.c.l.b16 %v459
        %v561 = vunpack.c.l.b16 %v473
        %v562 = vunpack.c.l.b16 %v487
        %v563 = vunpack.c.l.b16 %v501
        %v564 = vunpack.c.l.b16 %v515
        %v565 = vunpack.c.l.b16 %v529
        %v566 = vunpack.c.l.b16 %v543
        %v567 = vunpack.c.l.b16 %v557
        %v568 = vpack.c.b16 %v561, %v560
        %v569 = vpack.c.b16 %v563, %v562
        %v570 = vpack.c.b16 %v565, %v564
        %v571 = vpack.c.b16 %v567, %v566
        %v573 = vsel %vm242, %v568, 0
        %v576 = vsel %vm242, %v569, 0
        %v579 = vsel %vm242, %v570, 0
        %v582 = vsel %vm242, %v571, 0
        %v585 = vand.u32 %v559, %v258
        %587 = vmatprep.subr.bf16.mxu0 0
        %588 = vmatpush1.bf16.msra.mxu0 0
        %589 = vmatprep.subr.bf16.mxu0 0
        %590 = vmatpush1.bf16.msra.mxu0 0
        %591 = vmatprep.subr.bf16.mxu0 0
        %592 = vmatpush1.bf16.msra.mxu0 0
        %593 = vmatprep.subr.bf16.mxu0 0
        %594 = vmatpush1.bf16.msra.mxu0 0
        %595 = vmatprep.subr.bf16.mxu0 0
        %596 = vmatpush1.bf16.msra.mxu0 0
        %597 = vmatprep.subr.bf16.mxu0 0
        %598 = vmatpush1.bf16.msra.mxu0 0
        %599 = vmatprep.subr.bf16.mxu0 0
        %600 = vmatpush1.bf16.msra.mxu0 0
        %601 = vmatprep.subr.bf16.mxu0 0
        %602 = vmatpush1.bf16.msra.mxu0 %v585
        %603 = vmatprep.subr.bf16.mxu0 0
        %604 = vmatpush2.bf16.msra.mxu0 0
        %605 = vmatprep.subr.bf16.mxu0 0
        %606 = vmatpush2.bf16.msra.mxu0 0
        %607 = vmatprep.subr.bf16.mxu0 0
        %608 = vmatpush2.bf16.msra.mxu0 0
        %609 = vmatprep.subr.bf16.mxu0 0
        %610 = vmatpush2.bf16.msra.mxu0 0
        %611 = vmatprep.subr.bf16.mxu0 0
        %612 = vmatpush2.bf16.msra.mxu0 0
        %613 = vmatprep.subr.bf16.mxu0 0
        %614 = vmatpush2.bf16.msra.mxu0 0
        %615 = vmatprep.subr.bf16.mxu0 0
        %616 = vmatpush2.bf16.msra.mxu0 0
        %617 = vmatprep.subr.bf16.mxu0 0
        %618 = vmatpush2.bf16.msra.mxu0 0
        %619 = vmatprep.mubr.bf16.mxu0 0
        %620 = vmatmul.mubr.bf16.gmra.mxu0 %v573
        %v621 = vpop.f32.mrf.mxu0
        %v622 = vadd.f32 0.0, %v621
        %v623 = vpop.f32.mrf.mxu0
        %v624 = vpop.f32.mrf.mxu0
        %v625 = vadd.f32 0.0, %v624
        %v626 = vpop.f32.mrf.mxu0
        %627 = vmatprep.mubr.bf16.mxu0 0
        %628 = vmatmul.mubr.bf16.gmra.mxu0 %v576
        %v629 = vpop.f32.mrf.mxu0
        %v630 = vadd.f32 0.0, %v629
        %v631 = vpop.f32.mrf.mxu0
        %v632 = vpop.f32.mrf.mxu0
        %v633 = vadd.f32 0.0, %v632
        %v634 = vpop.f32.mrf.mxu0
        %635 = vmatprep.mubr.bf16.mxu0 0
        %636 = vmatmul.mubr.bf16.gmra.mxu0 %v579
        %v637 = vpop.f32.mrf.mxu0
        %v638 = vadd.f32 0.0, %v637
        %v639 = vpop.f32.mrf.mxu0
        %v640 = vpop.f32.mrf.mxu0
        %v641 = vadd.f32 0.0, %v640
        %v642 = vpop.f32.mrf.mxu0
        %643 = vmatprep.mubr.bf16.mxu0 0
        %644 = vmatmul.mubr.bf16.gmra.mxu0 %v582
        %v645 = vpop.f32.mrf.mxu0
        %v646 = vadd.f32 0.0, %v645
        %v647 = vpop.f32.mrf.mxu0
        %v648 = vpop.f32.mrf.mxu0
        %v649 = vadd.f32 0.0, %v648
        %v650 = vpop.f32.mrf.mxu0
        %651 = vdwg.mxu0
        %v652 = vadd.f32 %v397, %v622
        %v653 = vadd.f32 %v400, %v625
        %v654 = vadd.f32 %v405, %v630
        %v655 = vadd.f32 %v408, %v633
        %v656 = vadd.f32 %v413, %v638
        %v657 = vadd.f32 %v416, %v641
        %v658 = vadd.f32 %v421, %v646
        %v659 = vadd.f32 %v424, %v649
        %s660 = scalar_lea.vmem %s199, 144
        %v661 = vld [vmem:[%s660] sm:$0xf]
        %v662 = vld [vmem:[%s660 + $0x8] sm:$0xf]
        %v663 = vld [vmem:[%s660 + $0x10] sm:$0xf]
        %v664 = vld [vmem:[%s660 + $0x18] sm:$0xf]
        %v665 = vld [vmem:[%s660 + $0x20] sm:$0xf]
        %v666 = vld [vmem:[%s660 + $0x28] sm:$0xf]
        %v667 = vld [vmem:[%s660 + $0x30] sm:$0xf]
        %v668 = vld [vmem:[%s660 + $0x38] sm:$0xf]
        %s669 = scalar_lea.vmem %s1, 6
        %v670 = vld [vmem:[%s669] sm:$0x3]
        %v679 = vunpack.c.l.b16 %v661
        %v680 = vunpack.c.l.b16 %v662
        %v681 = vunpack.c.l.b16 %v663
        %v682 = vunpack.c.l.b16 %v664
        %v683 = vunpack.c.l.b16 %v665
        %v684 = vunpack.c.l.b16 %v666
        %v685 = vunpack.c.l.b16 %v667
        %v686 = vunpack.c.l.b16 %v668
        %v687 = vpack.c.b16 %v680, %v679
        %v688 = vpack.c.b16 %v682, %v681
        %v689 = vpack.c.b16 %v684, %v683
        %v690 = vpack.c.b16 %v686, %v685
        %v692 = vsel %vm242, %v687, 0
        %v695 = vsel %vm242, %v688, 0
        %v698 = vsel %vm242, %v689, 0
        %v701 = vsel %vm242, %v690, 0
        %v704 = vand.u32 %v670, %v258
        %706 = vmatprep.subr.bf16.mxu0 0
        %707 = vmatpush1.bf16.msra.mxu0 0
        %708 = vmatprep.subr.bf16.mxu0 0
        %709 = vmatpush1.bf16.msra.mxu0 0
        %710 = vmatprep.subr.bf16.mxu0 0
        %711 = vmatpush1.bf16.msra.mxu0 0
        %712 = vmatprep.subr.bf16.mxu0 0
        %713 = vmatpush1.bf16.msra.mxu0 0
        %714 = vmatprep.subr.bf16.mxu0 0
        %715 = vmatpush1.bf16.msra.mxu0 0
        %716 = vmatprep.subr.bf16.mxu0 0
        %717 = vmatpush1.bf16.msra.mxu0 0
        %718 = vmatprep.subr.bf16.mxu0 0
        %719 = vmatpush1.bf16.msra.mxu0 0
        %720 = vmatprep.subr.bf16.mxu0 0
        %721 = vmatpush1.bf16.msra.mxu0 %v704
        %722 = vmatprep.subr.bf16.mxu0 0
        %723 = vmatpush2.bf16.msra.mxu0 0
        %724 = vmatprep.subr.bf16.mxu0 0
        %725 = vmatpush2.bf16.msra.mxu0 0
        %726 = vmatprep.subr.bf16.mxu0 0
        %727 = vmatpush2.bf16.msra.mxu0 0
        %728 = vmatprep.subr.bf16.mxu0 0
        %729 = vmatpush2.bf16.msra.mxu0 0
        %730 = vmatprep.subr.bf16.mxu0 0
        %731 = vmatpush2.bf16.msra.mxu0 0
        %732 = vmatprep.subr.bf16.mxu0 0
        %733 = vmatpush2.bf16.msra.mxu0 0
        %734 = vmatprep.subr.bf16.mxu0 0
        %735 = vmatpush2.bf16.msra.mxu0 0
        %736 = vmatprep.subr.bf16.mxu0 0
        %737 = vmatpush2.bf16.msra.mxu0 0
        %738 = vmatprep.mubr.bf16.mxu0 0
        %739 = vmatmul.mubr.bf16.gmra.mxu0 %v692
        %v740 = vpop.f32.mrf.mxu0
        %v741 = vadd.f32 0.0, %v740
        %v742 = vpop.f32.mrf.mxu0
        %v743 = vpop.f32.mrf.mxu0
        %v744 = vadd.f32 0.0, %v743
        %v745 = vpop.f32.mrf.mxu0
        %746 = vmatprep.mubr.bf16.mxu0 0
        %747 = vmatmul.mubr.bf16.gmra.mxu0 %v695
        %v748 = vpop.f32.mrf.mxu0
        %v749 = vadd.f32 0.0, %v748
        %v750 = vpop.f32.mrf.mxu0
        %v751 = vpop.f32.mrf.mxu0
        %v752 = vadd.f32 0.0, %v751
        %v753 = vpop.f32.mrf.mxu0
        %754 = vmatprep.mubr.bf16.mxu0 0
        %755 = vmatmul.mubr.bf16.gmra.mxu0 %v698
        %v756 = vpop.f32.mrf.mxu0
        %v757 = vadd.f32 0.0, %v756
        %v758 = vpop.f32.mrf.mxu0
        %v759 = vpop.f32.mrf.mxu0
        %v760 = vadd.f32 0.0, %v759
        %v761 = vpop.f32.mrf.mxu0
        %762 = vmatprep.mubr.bf16.mxu0 0
        %763 = vmatmul.mubr.bf16.gmra.mxu0 %v701
        %v764 = vpop.f32.mrf.mxu0
        %v765 = vadd.f32 0.0, %v764
        %v766 = vpop.f32.mrf.mxu0
        %v767 = vpop.f32.mrf.mxu0
        %v768 = vadd.f32 0.0, %v767
        %v769 = vpop.f32.mrf.mxu0
        %770 = vdwg.mxu0
        %v771 = vadd.f32 %v652, %v741
        %v772 = vadd.f32 %v653, %v744
        %v773 = vadd.f32 %v654, %v749
        %v774 = vadd.f32 %v655, %v752
        %v775 = vadd.f32 %v656, %v757
        %v776 = vadd.f32 %v657, %v760
        %v777 = vadd.f32 %v658, %v765
        %v778 = vadd.f32 %v659, %v768
        %s779 = scalar_lea.vmem %s199, 216
        %v780 = vld [vmem:[%s779] sm:$0xf]
        %v781 = vld [vmem:[%s779 + $0x8] sm:$0xf]
        %v782 = vld [vmem:[%s779 + $0x10] sm:$0xf]
        %v783 = vld [vmem:[%s779 + $0x18] sm:$0xf]
        %v784 = vld [vmem:[%s779 + $0x20] sm:$0xf]
        %v785 = vld [vmem:[%s779 + $0x28] sm:$0xf]
        %v786 = vld [vmem:[%s779 + $0x30] sm:$0xf]
        %v787 = vld [vmem:[%s779 + $0x38] sm:$0xf]
        %s788 = scalar_lea.vmem %s1, 8
        %v789 = vld [vmem:[%s788] sm:$0x3]
        %v798 = vunpack.c.l.b16 %v780
        %v799 = vunpack.c.l.b16 %v781
        %v800 = vunpack.c.l.b16 %v782
        %v801 = vunpack.c.l.b16 %v783
        %v802 = vunpack.c.l.b16 %v784
        %v803 = vunpack.c.l.b16 %v785
        %v804 = vunpack.c.l.b16 %v786
        %v805 = vunpack.c.l.b16 %v787
        %v806 = vpack.c.b16 %v799, %v798
        %v807 = vpack.c.b16 %v801, %v800
        %v808 = vpack.c.b16 %v803, %v802
        %v809 = vpack.c.b16 %v805, %v804
        %v811 = vsel %vm242, %v806, 0
        %v814 = vsel %vm242, %v807, 0
        %v817 = vsel %vm242, %v808, 0
        %v820 = vsel %vm242, %v809, 0
        %v823 = vand.u32 %v789, %v258
        %825 = vmatprep.subr.bf16.mxu0 0
        %826 = vmatpush1.bf16.msra.mxu0 0
        %827 = vmatprep.subr.bf16.mxu0 0
        %828 = vmatpush1.bf16.msra.mxu0 0
        %829 = vmatprep.subr.bf16.mxu0 0
        %830 = vmatpush1.bf16.msra.mxu0 0
        %831 = vmatprep.subr.bf16.mxu0 0
        %832 = vmatpush1.bf16.msra.mxu0 0
        %833 = vmatprep.subr.bf16.mxu0 0
        %834 = vmatpush1.bf16.msra.mxu0 0
        %835 = vmatprep.subr.bf16.mxu0 0
        %836 = vmatpush1.bf16.msra.mxu0 0
        %837 = vmatprep.subr.bf16.mxu0 0
        %838 = vmatpush1.bf16.msra.mxu0 0
        %839 = vmatprep.subr.bf16.mxu0 0
        %840 = vmatpush1.bf16.msra.mxu0 %v823
        %841 = vmatprep.subr.bf16.mxu0 0
        %842 = vmatpush2.bf16.msra.mxu0 0
        %843 = vmatprep.subr.bf16.mxu0 0
        %844 = vmatpush2.bf16.msra.mxu0 0
        %845 = vmatprep.subr.bf16.mxu0 0
        %846 = vmatpush2.bf16.msra.mxu0 0
        %847 = vmatprep.subr.bf16.mxu0 0
        %848 = vmatpush2.bf16.msra.mxu0 0
        %849 = vmatprep.subr.bf16.mxu0 0
        %850 = vmatpush2.bf16.msra.mxu0 0
        %851 = vmatprep.subr.bf16.mxu0 0
        %852 = vmatpush2.bf16.msra.mxu0 0
        %853 = vmatprep.subr.bf16.mxu0 0
        %854 = vmatpush2.bf16.msra.mxu0 0
        %855 = vmatprep.subr.bf16.mxu0 0
        %856 = vmatpush2.bf16.msra.mxu0 0
        %857 = vmatprep.mubr.bf16.mxu0 0
        %858 = vmatmul.mubr.bf16.gmra.mxu0 %v811
        %v859 = vpop.f32.mrf.mxu0
        %v860 = vadd.f32 0.0, %v859
        %v861 = vpop.f32.mrf.mxu0
        %v862 = vpop.f32.mrf.mxu0
        %v863 = vadd.f32 0.0, %v862
        %v864 = vpop.f32.mrf.mxu0
        %865 = vmatprep.mubr.bf16.mxu0 0
        %866 = vmatmul.mubr.bf16.gmra.mxu0 %v814
        %v867 = vpop.f32.mrf.mxu0
        %v868 = vadd.f32 0.0, %v867
        %v869 = vpop.f32.mrf.mxu0
        %v870 = vpop.f32.mrf.mxu0
        %v871 = vadd.f32 0.0, %v870
        %v872 = vpop.f32.mrf.mxu0
        %873 = vmatprep.mubr.bf16.mxu0 0
        %874 = vmatmul.mubr.bf16.gmra.mxu0 %v817
        %v875 = vpop.f32.mrf.mxu0
        %v876 = vadd.f32 0.0, %v875
        %v877 = vpop.f32.mrf.mxu0
        %v878 = vpop.f32.mrf.mxu0
        %v879 = vadd.f32 0.0, %v878
        %v880 = vpop.f32.mrf.mxu0
        %881 = vmatprep.mubr.bf16.mxu0 0
        %882 = vmatmul.mubr.bf16.gmra.mxu0 %v820
        %v883 = vpop.f32.mrf.mxu0
        %v884 = vadd.f32 0.0, %v883
        %v885 = vpop.f32.mrf.mxu0
        %v886 = vpop.f32.mrf.mxu0
        %v887 = vadd.f32 0.0, %v886
        %v888 = vpop.f32.mrf.mxu0
        %889 = vdwg.mxu0
        %v890 = vadd.f32 %v771, %v860
        %v891 = vadd.f32 %v772, %v863
        %v892 = vadd.f32 %v773, %v868
        %v893 = vadd.f32 %v774, %v871
        %v894 = vadd.f32 %v775, %v876
        %v895 = vadd.f32 %v776, %v879
        %v896 = vadd.f32 %v777, %v884
        %v897 = vadd.f32 %v778, %v887
        %v898 = vld [vmem:[%s660] sm:$0xf]
        %v899 = vld [vmem:[%s660 + $0x4] sm:$0x1]
        %v900 = vld [vmem:[%s660 + $0x8] sm:$0xf]
        %v901 = vld [vmem:[%s660 + $0xc] sm:$0x1]
        %v902 = vld [vmem:[%s660 + $0x10] sm:$0xf]
        %v903 = vld [vmem:[%s660 + $0x14] sm:$0x1]
        %v904 = vld [vmem:[%s660 + $0x18] sm:$0xf]
        %v905 = vld [vmem:[%s660 + $0x1c] sm:$0x1]
        %v906 = vld [vmem:[%s660 + $0x20] sm:$0xf]
        %v907 = vld [vmem:[%s660 + $0x24] sm:$0x1]
        %v908 = vld [vmem:[%s660 + $0x28] sm:$0xf]
        %v909 = vld [vmem:[%s660 + $0x2c] sm:$0x1]
        %v910 = vld [vmem:[%s660 + $0x30] sm:$0xf]
        %v911 = vld [vmem:[%s660 + $0x34] sm:$0x1]
        %v912 = vld [vmem:[%s660 + $0x38] sm:$0xf]
        %v913 = vld [vmem:[%s660 + $0x3c] sm:$0x1]
        %v915 = vshrl.u32 %v898, 16
        %v917 = vrot.slane %v915, 4
        %v918 = vshll.u32 %v898, 16
        %v920 = vrot.slane %v918, 5
        %v921 = vor.u32 %v917, %v920
        %v922 = vrot.slane %v921, 4
        %v924 = vshll.u32 %v899, 16
        %v926 = vrot.slane %v924, 5
        %v927 = vsel %vm445, %v922, %v926
        %v929 = vshrl.u32 %v900, 16
        %v931 = vrot.slane %v929, 4
        %v932 = vshll.u32 %v900, 16
        %v934 = vrot.slane %v932, 5
        %v935 = vor.u32 %v931, %v934
        %v936 = vrot.slane %v935, 4
        %v938 = vshll.u32 %v901, 16
        %v940 = vrot.slane %v938, 5
        %v941 = vsel %vm445, %v936, %v940
        %v943 = vshrl.u32 %v902, 16
        %v945 = vrot.slane %v943, 4
        %v946 = vshll.u32 %v902, 16
        %v948 = vrot.slane %v946, 5
        %v949 = vor.u32 %v945, %v948
        %v950 = vrot.slane %v949, 4
        %v952 = vshll.u32 %v903, 16
        %v954 = vrot.slane %v952, 5
        %v955 = vsel %vm445, %v950, %v954
        %v957 = vshrl.u32 %v904, 16
        %v959 = vrot.slane %v957, 4
        %v960 = vshll.u32 %v904, 16
        %v962 = vrot.slane %v960, 5
        %v963 = vor.u32 %v959, %v962
        %v964 = vrot.slane %v963, 4
        %v966 = vshll.u32 %v905, 16
        %v968 = vrot.slane %v966, 5
        %v969 = vsel %vm445, %v964, %v968
        %v971 = vshrl.u32 %v906, 16
        %v973 = vrot.slane %v971, 4
        %v974 = vshll.u32 %v906, 16
        %v976 = vrot.slane %v974, 5
        %v977 = vor.u32 %v973, %v976
        %v978 = vrot.slane %v977, 4
        %v980 = vshll.u32 %v907, 16
        %v982 = vrot.slane %v980, 5
        %v983 = vsel %vm445, %v978, %v982
        %v985 = vshrl.u32 %v908, 16
        %v987 = vrot.slane %v985, 4
        %v988 = vshll.u32 %v908, 16
        %v990 = vrot.slane %v988, 5
        %v991 = vor.u32 %v987, %v990
        %v992 = vrot.slane %v991, 4
        %v994 = vshll.u32 %v909, 16
        %v996 = vrot.slane %v994, 5
        %v997 = vsel %vm445, %v992, %v996
        %v999 = vshrl.u32 %v910, 16
        %v1001 = vrot.slane %v999, 4
        %v1002 = vshll.u32 %v910, 16
        %v1004 = vrot.slane %v1002, 5
        %v1005 = vor.u32 %v1001, %v1004
        %v1006 = vrot.slane %v1005, 4
        %v1008 = vshll.u32 %v911, 16
        %v1010 = vrot.slane %v1008, 5
        %v1011 = vsel %vm445, %v1006, %v1010
        %v1013 = vshrl.u32 %v912, 16
        %v1015 = vrot.slane %v1013, 4
        %v1016 = vshll.u32 %v912, 16
        %v1018 = vrot.slane %v1016, 5
        %v1019 = vor.u32 %v1015, %v1018
        %v1020 = vrot.slane %v1019, 4
        %v1022 = vshll.u32 %v913, 16
        %v1024 = vrot.slane %v1022, 5
        %v1025 = vsel %vm445, %v1020, %v1024
        %s1026 = scalar_lea.vmem %s1, 10
        %v1027 = vld [vmem:[%s1026] sm:$0x3]
        %v1028 = vunpack.c.l.b16 %v927
        %v1029 = vunpack.c.l.b16 %v941
        %v1030 = vunpack.c.l.b16 %v955
        %v1031 = vunpack.c.l.b16 %v969
        %v1032 = vunpack.c.l.b16 %v983
        %v1033 = vunpack.c.l.b16 %v997
        %v1034 = vunpack.c.l.b16 %v1011
        %v1035 = vunpack.c.l.b16 %v1025
        %v1036 = vpack.c.b16 %v1029, %v1028
        %v1037 = vpack.c.b16 %v1031, %v1030
        %v1038 = vpack.c.b16 %v1033, %v1032
        %v1039 = vpack.c.b16 %v1035, %v1034
        %v1041 = vsel %vm242, %v1036, 0
        %v1044 = vsel %vm242, %v1037, 0
        %v1047 = vsel %vm242, %v1038, 0
        %v1050 = vsel %vm242, %v1039, 0
        %v1053 = vand.u32 %v1027, %v258
        %1055 = vmatprep.subr.bf16.mxu0 0
        %1056 = vmatpush1.bf16.msra.mxu0 0
        %1057 = vmatprep.subr.bf16.mxu0 0
        %1058 = vmatpush1.bf16.msra.mxu0 0
        %1059 = vmatprep.subr.bf16.mxu0 0
        %1060 = vmatpush1.bf16.msra.mxu0 0
        %1061 = vmatprep.subr.bf16.mxu0 0
        %1062 = vmatpush1.bf16.msra.mxu0 0
        %1063 = vmatprep.subr.bf16.mxu0 0
        %1064 = vmatpush1.bf16.msra.mxu0 0
        %1065 = vmatprep.subr.bf16.mxu0 0
        %1066 = vmatpush1.bf16.msra.mxu0 0
        %1067 = vmatprep.subr.bf16.mxu0 0
        %1068 = vmatpush1.bf16.msra.mxu0 0
        %1069 = vmatprep.subr.bf16.mxu0 0
        %1070 = vmatpush1.bf16.msra.mxu0 %v1053
        %1071 = vmatprep.subr.bf16.mxu0 0
        %1072 = vmatpush2.bf16.msra.mxu0 0
        %1073 = vmatprep.subr.bf16.mxu0 0
        %1074 = vmatpush2.bf16.msra.mxu0 0
        %1075 = vmatprep.subr.bf16.mxu0 0
        %1076 = vmatpush2.bf16.msra.mxu0 0
        %1077 = vmatprep.subr.bf16.mxu0 0
        %1078 = vmatpush2.bf16.msra.mxu0 0
        %1079 = vmatprep.subr.bf16.mxu0 0
        %1080 = vmatpush2.bf16.msra.mxu0 0
        %1081 = vmatprep.subr.bf16.mxu0 0
        %1082 = vmatpush2.bf16.msra.mxu0 0
        %1083 = vmatprep.subr.bf16.mxu0 0
        %1084 = vmatpush2.bf16.msra.mxu0 0
        %1085 = vmatprep.subr.bf16.mxu0 0
        %1086 = vmatpush2.bf16.msra.mxu0 0
        %1087 = vmatprep.mubr.bf16.mxu0 0
        %1088 = vmatmul.mubr.bf16.gmra.mxu0 %v1041
        %v1089 = vpop.f32.mrf.mxu0
        %v1090 = vadd.f32 0.0, %v1089
        %v1091 = vpop.f32.mrf.mxu0
        %v1092 = vpop.f32.mrf.mxu0
        %v1093 = vadd.f32 0.0, %v1092
        %v1094 = vpop.f32.mrf.mxu0
        %1095 = vmatprep.mubr.bf16.mxu0 0
        %1096 = vmatmul.mubr.bf16.gmra.mxu0 %v1044
        %v1097 = vpop.f32.mrf.mxu0
        %v1098 = vadd.f32 0.0, %v1097
        %v1099 = vpop.f32.mrf.mxu0
        %v1100 = vpop.f32.mrf.mxu0
        %v1101 = vadd.f32 0.0, %v1100
        %v1102 = vpop.f32.mrf.mxu0
        %1103 = vmatprep.mubr.bf16.mxu0 0
        %1104 = vmatmul.mubr.bf16.gmra.mxu0 %v1047
        %v1105 = vpop.f32.mrf.mxu0
        %v1106 = vadd.f32 0.0, %v1105
        %v1107 = vpop.f32.mrf.mxu0
        %v1108 = vpop.f32.mrf.mxu0
        %v1109 = vadd.f32 0.0, %v1108
        %v1110 = vpop.f32.mrf.mxu0
        %1111 = vmatprep.mubr.bf16.mxu0 0
        %1112 = vmatmul.mubr.bf16.gmra.mxu0 %v1050
        %v1113 = vpop.f32.mrf.mxu0
        %v1114 = vadd.f32 0.0, %v1113
        %v1115 = vpop.f32.mrf.mxu0
        %v1116 = vpop.f32.mrf.mxu0
        %v1117 = vadd.f32 0.0, %v1116
        %v1118 = vpop.f32.mrf.mxu0
        %1119 = vdwg.mxu0
        %v1120 = vadd.f32 %v890, %v1090
        %v1121 = vadd.f32 %v891, %v1093
        %v1122 = vadd.f32 %v892, %v1098
        %v1123 = vadd.f32 %v893, %v1101
        %v1124 = vadd.f32 %v894, %v1106
        %v1125 = vadd.f32 %v895, %v1109
        %v1126 = vadd.f32 %v896, %v1114
        %v1127 = vadd.f32 %v897, %v1117
        %s1128 = scalar_lea.vmem %s199, 8
        %v1129 = vld [vmem:[%s1128] sm:$0xf]
        %v1130 = vld [vmem:[%s1128 + $0x8] sm:$0xf]
        %v1131 = vld [vmem:[%s1128 + $0x10] sm:$0xf]
        %v1132 = vld [vmem:[%s1128 + $0x18] sm:$0xf]
        %v1133 = vld [vmem:[%s1128 + $0x20] sm:$0xf]
        %v1134 = vld [vmem:[%s1128 + $0x28] sm:$0xf]
        %v1135 = vld [vmem:[%s1128 + $0x30] sm:$0xf]
        %v1136 = vld [vmem:[%s1128 + $0x38] sm:$0xf]
        %s1137 = scalar_lea.vmem %s1, 12
        %v1138 = vld [vmem:[%s1137] sm:$0x3]
        %v1147 = vunpack.c.l.b16 %v1129
        %v1148 = vunpack.c.l.b16 %v1130
        %v1149 = vunpack.c.l.b16 %v1131
        %v1150 = vunpack.c.l.b16 %v1132
        %v1151 = vunpack.c.l.b16 %v1133
        %v1152 = vunpack.c.l.b16 %v1134
        %v1153 = vunpack.c.l.b16 %v1135
        %v1154 = vunpack.c.l.b16 %v1136
        %v1155 = vpack.c.b16 %v1148, %v1147
        %v1156 = vpack.c.b16 %v1150, %v1149
        %v1157 = vpack.c.b16 %v1152, %v1151
        %v1158 = vpack.c.b16 %v1154, %v1153
        %v1160 = vsel %vm242, %v1155, 0
        %v1163 = vsel %vm242, %v1156, 0
        %v1166 = vsel %vm242, %v1157, 0
        %v1169 = vsel %vm242, %v1158, 0
        %v1172 = vand.u32 %v1138, %v258
        %1174 = vmatprep.subr.bf16.mxu0 0
        %1175 = vmatpush1.bf16.msra.mxu0 0
        %1176 = vmatprep.subr.bf16.mxu0 0
        %1177 = vmatpush1.bf16.msra.mxu0 0
        %1178 = vmatprep.subr.bf16.mxu0 0
        %1179 = vmatpush1.bf16.msra.mxu0 0
        %1180 = vmatprep.subr.bf16.mxu0 0
        %1181 = vmatpush1.bf16.msra.mxu0 0
        %1182 = vmatprep.subr.bf16.mxu0 0
        %1183 = vmatpush1.bf16.msra.mxu0 0
        %1184 = vmatprep.subr.bf16.mxu0 0
        %1185 = vmatpush1.bf16.msra.mxu0 0
        %1186 = vmatprep.subr.bf16.mxu0 0
        %1187 = vmatpush1.bf16.msra.mxu0 0
        %1188 = vmatprep.subr.bf16.mxu0 0
        %1189 = vmatpush1.bf16.msra.mxu0 %v1172
        %1190 = vmatprep.subr.bf16.mxu0 0
        %1191 = vmatpush2.bf16.msra.mxu0 0
        %1192 = vmatprep.subr.bf16.mxu0 0
        %1193 = vmatpush2.bf16.msra.mxu0 0
        %1194 = vmatprep.subr.bf16.mxu0 0
        %1195 = vmatpush2.bf16.msra.mxu0 0
        %1196 = vmatprep.subr.bf16.mxu0 0
        %1197 = vmatpush2.bf16.msra.mxu0 0
        %1198 = vmatprep.subr.bf16.mxu0 0
        %1199 = vmatpush2.bf16.msra.mxu0 0
        %1200 = vmatprep.subr.bf16.mxu0 0
        %1201 = vmatpush2.bf16.msra.mxu0 0
        %1202 = vmatprep.subr.bf16.mxu0 0
        %1203 = vmatpush2.bf16.msra.mxu0 0
        %1204 = vmatprep.subr.bf16.mxu0 0
        %1205 = vmatpush2.bf16.msra.mxu0 0
        %1206 = vmatprep.mubr.bf16.mxu0 0
        %1207 = vmatmul.mubr.bf16.gmra.mxu0 %v1160
        %v1208 = vpop.f32.mrf.mxu0
        %v1209 = vadd.f32 0.0, %v1208
        %v1210 = vpop.f32.mrf.mxu0
        %v1211 = vpop.f32.mrf.mxu0
        %v1212 = vadd.f32 0.0, %v1211
        %v1213 = vpop.f32.mrf.mxu0
        %1214 = vmatprep.mubr.bf16.mxu0 0
        %1215 = vmatmul.mubr.bf16.gmra.mxu0 %v1163
        %v1216 = vpop.f32.mrf.mxu0
        %v1217 = vadd.f32 0.0, %v1216
        %v1218 = vpop.f32.mrf.mxu0
        %v1219 = vpop.f32.mrf.mxu0
        %v1220 = vadd.f32 0.0, %v1219
        %v1221 = vpop.f32.mrf.mxu0
        %1222 = vmatprep.mubr.bf16.mxu0 0
        %1223 = vmatmul.mubr.bf16.gmra.mxu0 %v1166
        %v1224 = vpop.f32.mrf.mxu0
        %v1225 = vadd.f32 0.0, %v1224
        %v1226 = vpop.f32.mrf.mxu0
        %v1227 = vpop.f32.mrf.mxu0
        %v1228 = vadd.f32 0.0, %v1227
        %v1229 = vpop.f32.mrf.mxu0
        %1230 = vmatprep.mubr.bf16.mxu0 0
        %1231 = vmatmul.mubr.bf16.gmra.mxu0 %v1169
        %v1232 = vpop.f32.mrf.mxu0
        %v1233 = vadd.f32 0.0, %v1232
        %v1234 = vpop.f32.mrf.mxu0
        %v1235 = vpop.f32.mrf.mxu0
        %v1236 = vadd.f32 0.0, %v1235
        %v1237 = vpop.f32.mrf.mxu0
        %1238 = vdwg.mxu0
        %v1239 = vadd.f32 %v1120, %v1209
        %v1240 = vadd.f32 %v1121, %v1212
        %v1241 = vadd.f32 %v1122, %v1217
        %v1242 = vadd.f32 %v1123, %v1220
        %v1243 = vadd.f32 %v1124, %v1225
        %v1244 = vadd.f32 %v1125, %v1228
        %v1245 = vadd.f32 %v1126, %v1233
        %v1246 = vadd.f32 %v1127, %v1236
        %s1247 = scalar_lea.vmem %s199, 80
        %v1248 = vld [vmem:[%s1247] sm:$0xf]
        %v1249 = vld [vmem:[%s1247 + $0x8] sm:$0xf]
        %v1250 = vld [vmem:[%s1247 + $0x10] sm:$0xf]
        %v1251 = vld [vmem:[%s1247 + $0x18] sm:$0xf]
        %v1252 = vld [vmem:[%s1247 + $0x20] sm:$0xf]
        %v1253 = vld [vmem:[%s1247 + $0x28] sm:$0xf]
        %v1254 = vld [vmem:[%s1247 + $0x30] sm:$0xf]
        %v1255 = vld [vmem:[%s1247 + $0x38] sm:$0xf]
        %s1256 = scalar_lea.vmem %s1, 14
        %v1257 = vld [vmem:[%s1256] sm:$0x3]
        %v1266 = vunpack.c.l.b16 %v1248
        %v1267 = vunpack.c.l.b16 %v1249
        %v1268 = vunpack.c.l.b16 %v1250
        %v1269 = vunpack.c.l.b16 %v1251
        %v1270 = vunpack.c.l.b16 %v1252
        %v1271 = vunpack.c.l.b16 %v1253
        %v1272 = vunpack.c.l.b16 %v1254
        %v1273 = vunpack.c.l.b16 %v1255
        %v1274 = vpack.c.b16 %v1267, %v1266
        %v1275 = vpack.c.b16 %v1269, %v1268
        %v1276 = vpack.c.b16 %v1271, %v1270
        %v1277 = vpack.c.b16 %v1273, %v1272
        %v1279 = vsel %vm242, %v1274, 0
        %v1282 = vsel %vm242, %v1275, 0
        %v1285 = vsel %vm242, %v1276, 0
        %v1288 = vsel %vm242, %v1277, 0
        %v1291 = vand.u32 %v1257, %v258
        %1293 = vmatprep.subr.bf16.mxu0 0
        %1294 = vmatpush1.bf16.msra.mxu0 0
        %1295 = vmatprep.subr.bf16.mxu0 0
        %1296 = vmatpush1.bf16.msra.mxu0 0
        %1297 = vmatprep.subr.bf16.mxu0 0
        %1298 = vmatpush1.bf16.msra.mxu0 0
        %1299 = vmatprep.subr.bf16.mxu0 0
        %1300 = vmatpush1.bf16.msra.mxu0 0
        %1301 = vmatprep.subr.bf16.mxu0 0
        %1302 = vmatpush1.bf16.msra.mxu0 0
        %1303 = vmatprep.subr.bf16.mxu0 0
        %1304 = vmatpush1.bf16.msra.mxu0 0
        %1305 = vmatprep.subr.bf16.mxu0 0
        %1306 = vmatpush1.bf16.msra.mxu0 0
        %1307 = vmatprep.subr.bf16.mxu0 0
        %1308 = vmatpush1.bf16.msra.mxu0 %v1291
        %1309 = vmatprep.subr.bf16.mxu0 0
        %1310 = vmatpush2.bf16.msra.mxu0 0
        %1311 = vmatprep.subr.bf16.mxu0 0
        %1312 = vmatpush2.bf16.msra.mxu0 0
        %1313 = vmatprep.subr.bf16.mxu0 0
        %1314 = vmatpush2.bf16.msra.mxu0 0
        %1315 = vmatprep.subr.bf16.mxu0 0
        %1316 = vmatpush2.bf16.msra.mxu0 0
        %1317 = vmatprep.subr.bf16.mxu0 0
        %1318 = vmatpush2.bf16.msra.mxu0 0
        %1319 = vmatprep.subr.bf16.mxu0 0
        %1320 = vmatpush2.bf16.msra.mxu0 0
        %1321 = vmatprep.subr.bf16.mxu0 0
        %1322 = vmatpush2.bf16.msra.mxu0 0
        %1323 = vmatprep.subr.bf16.mxu0 0
        %1324 = vmatpush2.bf16.msra.mxu0 0
        %1325 = vmatprep.mubr.bf16.mxu0 0
        %1326 = vmatmul.mubr.bf16.gmra.mxu0 %v1279
        %v1327 = vpop.f32.mrf.mxu0
        %v1328 = vadd.f32 0.0, %v1327
        %v1329 = vpop.f32.mrf.mxu0
        %v1330 = vpop.f32.mrf.mxu0
        %v1331 = vadd.f32 0.0, %v1330
        %v1332 = vpop.f32.mrf.mxu0
        %1333 = vmatprep.mubr.bf16.mxu0 0
        %1334 = vmatmul.mubr.bf16.gmra.mxu0 %v1282
        %v1335 = vpop.f32.mrf.mxu0
        %v1336 = vadd.f32 0.0, %v1335
        %v1337 = vpop.f32.mrf.mxu0
        %v1338 = vpop.f32.mrf.mxu0
        %v1339 = vadd.f32 0.0, %v1338
        %v1340 = vpop.f32.mrf.mxu0
        %1341 = vmatprep.mubr.bf16.mxu0 0
        %1342 = vmatmul.mubr.bf16.gmra.mxu0 %v1285
        %v1343 = vpop.f32.mrf.mxu0
        %v1344 = vadd.f32 0.0, %v1343
        %v1345 = vpop.f32.mrf.mxu0
        %v1346 = vpop.f32.mrf.mxu0
        %v1347 = vadd.f32 0.0, %v1346
        %v1348 = vpop.f32.mrf.mxu0
        %1349 = vmatprep.mubr.bf16.mxu0 0
        %1350 = vmatmul.mubr.bf16.gmra.mxu0 %v1288
        %v1351 = vpop.f32.mrf.mxu0
        %v1352 = vadd.f32 0.0, %v1351
        %v1353 = vpop.f32.mrf.mxu0
        %v1354 = vpop.f32.mrf.mxu0
        %v1355 = vadd.f32 0.0, %v1354
        %v1356 = vpop.f32.mrf.mxu0
        %1357 = vdwg.mxu0
        %v1358 = vadd.f32 %v1239, %v1328
        %v1359 = vadd.f32 %v1240, %v1331
        %v1360 = vadd.f32 %v1241, %v1336
        %v1361 = vadd.f32 %v1242, %v1339
        %v1362 = vadd.f32 %v1243, %v1344
        %v1363 = vadd.f32 %v1244, %v1347
        %v1364 = vadd.f32 %v1245, %v1352
        %v1365 = vadd.f32 %v1246, %v1355
        %v1366 = vld [vmem:[%s1128] sm:$0xf]
        %v1367 = vld [vmem:[%s1128 + $0x4] sm:$0x1]
        %v1368 = vld [vmem:[%s1128 + $0x8] sm:$0xf]
        %v1369 = vld [vmem:[%s1128 + $0xc] sm:$0x1]
        %v1370 = vld [vmem:[%s1128 + $0x10] sm:$0xf]
        %v1371 = vld [vmem:[%s1128 + $0x14] sm:$0x1]
        %v1372 = vld [vmem:[%s1128 + $0x18] sm:$0xf]
        %v1373 = vld [vmem:[%s1128 + $0x1c] sm:$0x1]
        %v1374 = vld [vmem:[%s1128 + $0x20] sm:$0xf]
        %v1375 = vld [vmem:[%s1128 + $0x24] sm:$0x1]
        %v1376 = vld [vmem:[%s1128 + $0x28] sm:$0xf]
        %v1377 = vld [vmem:[%s1128 + $0x2c] sm:$0x1]
        %v1378 = vld [vmem:[%s1128 + $0x30] sm:$0xf]
        %v1379 = vld [vmem:[%s1128 + $0x34] sm:$0x1]
        %v1380 = vld [vmem:[%s1128 + $0x38] sm:$0xf]
        %v1381 = vld [vmem:[%s1128 + $0x3c] sm:$0x1]
        %v1383 = vshrl.u32 %v1366, 16
        %v1385 = vrot.slane %v1383, 4
        %v1386 = vshll.u32 %v1366, 16
        %v1388 = vrot.slane %v1386, 5
        %v1389 = vor.u32 %v1385, %v1388
        %v1390 = vrot.slane %v1389, 4
        %v1392 = vshll.u32 %v1367, 16
        %v1394 = vrot.slane %v1392, 5
        %v1395 = vsel %vm445, %v1390, %v1394
        %v1397 = vshrl.u32 %v1368, 16
        %v1399 = vrot.slane %v1397, 4
        %v1400 = vshll.u32 %v1368, 16
        %v1402 = vrot.slane %v1400, 5
        %v1403 = vor.u32 %v1399, %v1402
        %v1404 = vrot.slane %v1403, 4
        %v1406 = vshll.u32 %v1369, 16
        %v1408 = vrot.slane %v1406, 5
        %v1409 = vsel %vm445, %v1404, %v1408
        %v1411 = vshrl.u32 %v1370, 16
        %v1413 = vrot.slane %v1411, 4
        %v1414 = vshll.u32 %v1370, 16
        %v1416 = vrot.slane %v1414, 5
        %v1417 = vor.u32 %v1413, %v1416
        %v1418 = vrot.slane %v1417, 4
        %v1420 = vshll.u32 %v1371, 16
        %v1422 = vrot.slane %v1420, 5
        %v1423 = vsel %vm445, %v1418, %v1422
        %v1425 = vshrl.u32 %v1372, 16
        %v1427 = vrot.slane %v1425, 4
        %v1428 = vshll.u32 %v1372, 16
        %v1430 = vrot.slane %v1428, 5
        %v1431 = vor.u32 %v1427, %v1430
        %v1432 = vrot.slane %v1431, 4
        %v1434 = vshll.u32 %v1373, 16
        %v1436 = vrot.slane %v1434, 5
        %v1437 = vsel %vm445, %v1432, %v1436
        %v1439 = vshrl.u32 %v1374, 16
        %v1441 = vrot.slane %v1439, 4
        %v1442 = vshll.u32 %v1374, 16
        %v1444 = vrot.slane %v1442, 5
        %v1445 = vor.u32 %v1441, %v1444
        %v1446 = vrot.slane %v1445, 4
        %v1448 = vshll.u32 %v1375, 16
        %v1450 = vrot.slane %v1448, 5
        %v1451 = vsel %vm445, %v1446, %v1450
        %v1453 = vshrl.u32 %v1376, 16
        %v1455 = vrot.slane %v1453, 4
        %v1456 = vshll.u32 %v1376, 16
        %v1458 = vrot.slane %v1456, 5
        %v1459 = vor.u32 %v1455, %v1458
        %v1460 = vrot.slane %v1459, 4
        %v1462 = vshll.u32 %v1377, 16
        %v1464 = vrot.slane %v1462, 5
        %v1465 = vsel %vm445, %v1460, %v1464
        %v1467 = vshrl.u32 %v1378, 16
        %v1469 = vrot.slane %v1467, 4
        %v1470 = vshll.u32 %v1378, 16
        %v1472 = vrot.slane %v1470, 5
        %v1473 = vor.u32 %v1469, %v1472
        %v1474 = vrot.slane %v1473, 4
        %v1476 = vshll.u32 %v1379, 16
        %v1478 = vrot.slane %v1476, 5
        %v1479 = vsel %vm445, %v1474, %v1478
        %v1481 = vshrl.u32 %v1380, 16
        %v1483 = vrot.slane %v1481, 4
        %v1484 = vshll.u32 %v1380, 16
        %v1486 = vrot.slane %v1484, 5
        %v1487 = vor.u32 %v1483, %v1486
        %v1488 = vrot.slane %v1487, 4
        %v1490 = vshll.u32 %v1381, 16
        %v1492 = vrot.slane %v1490, 5
        %v1493 = vsel %vm445, %v1488, %v1492
        %s1494 = scalar_lea.vmem %s1, 16
        %v1495 = vld [vmem:[%s1494] sm:$0x3]
        %v1496 = vunpack.c.l.b16 %v1395
        %v1497 = vunpack.c.l.b16 %v1409
        %v1498 = vunpack.c.l.b16 %v1423
        %v1499 = vunpack.c.l.b16 %v1437
        %v1500 = vunpack.c.l.b16 %v1451
        %v1501 = vunpack.c.l.b16 %v1465
        %v1502 = vunpack.c.l.b16 %v1479
        %v1503 = vunpack.c.l.b16 %v1493
        %v1504 = vpack.c.b16 %v1497, %v1496
        %v1505 = vpack.c.b16 %v1499, %v1498
        %v1506 = vpack.c.b16 %v1501, %v1500
        %v1507 = vpack.c.b16 %v1503, %v1502
        %v1509 = vsel %vm242, %v1504, 0
        %v1512 = vsel %vm242, %v1505, 0
        %v1515 = vsel %vm242, %v1506, 0
        %v1518 = vsel %vm242, %v1507, 0
        %v1521 = vand.u32 %v1495, %v258
        %1523 = vmatprep.subr.bf16.mxu0 0
        %1524 = vmatpush1.bf16.msra.mxu0 0
        %1525 = vmatprep.subr.bf16.mxu0 0
        %1526 = vmatpush1.bf16.msra.mxu0 0
        %1527 = vmatprep.subr.bf16.mxu0 0
        %1528 = vmatpush1.bf16.msra.mxu0 0
        %1529 = vmatprep.subr.bf16.mxu0 0
        %1530 = vmatpush1.bf16.msra.mxu0 0
        %1531 = vmatprep.subr.bf16.mxu0 0
        %1532 = vmatpush1.bf16.msra.mxu0 0
        %1533 = vmatprep.subr.bf16.mxu0 0
        %1534 = vmatpush1.bf16.msra.mxu0 0
        %1535 = vmatprep.subr.bf16.mxu0 0
        %1536 = vmatpush1.bf16.msra.mxu0 0
        %1537 = vmatprep.subr.bf16.mxu0 0
        %1538 = vmatpush1.bf16.msra.mxu0 %v1521
        %1539 = vmatprep.subr.bf16.mxu0 0
        %1540 = vmatpush2.bf16.msra.mxu0 0
        %1541 = vmatprep.subr.bf16.mxu0 0
        %1542 = vmatpush2.bf16.msra.mxu0 0
        %1543 = vmatprep.subr.bf16.mxu0 0
        %1544 = vmatpush2.bf16.msra.mxu0 0
        %1545 = vmatprep.subr.bf16.mxu0 0
        %1546 = vmatpush2.bf16.msra.mxu0 0
        %1547 = vmatprep.subr.bf16.mxu0 0
        %1548 = vmatpush2.bf16.msra.mxu0 0
        %1549 = vmatprep.subr.bf16.mxu0 0
        %1550 = vmatpush2.bf16.msra.mxu0 0
        %1551 = vmatprep.subr.bf16.mxu0 0
        %1552 = vmatpush2.bf16.msra.mxu0 0
        %1553 = vmatprep.subr.bf16.mxu0 0
        %1554 = vmatpush2.bf16.msra.mxu0 0
        %1555 = vmatprep.mubr.bf16.mxu0 0
        %1556 = vmatmul.mubr.bf16.gmra.mxu0 %v1509
        %v1557 = vpop.f32.mrf.mxu0
        %v1558 = vadd.f32 0.0, %v1557
        %v1559 = vpop.f32.mrf.mxu0
        %v1560 = vpop.f32.mrf.mxu0
        %v1561 = vadd.f32 0.0, %v1560
        %v1562 = vpop.f32.mrf.mxu0
        %1563 = vmatprep.mubr.bf16.mxu0 0
        %1564 = vmatmul.mubr.bf16.gmra.mxu0 %v1512
        %v1565 = vpop.f32.mrf.mxu0
        %v1566 = vadd.f32 0.0, %v1565
        %v1567 = vpop.f32.mrf.mxu0
        %v1568 = vpop.f32.mrf.mxu0
        %v1569 = vadd.f32 0.0, %v1568
        %v1570 = vpop.f32.mrf.mxu0
        %1571 = vmatprep.mubr.bf16.mxu0 0
        %1572 = vmatmul.mubr.bf16.gmra.mxu0 %v1515
        %v1573 = vpop.f32.mrf.mxu0
        %v1574 = vadd.f32 0.0, %v1573
        %v1575 = vpop.f32.mrf.mxu0
        %v1576 = vpop.f32.mrf.mxu0
        %v1577 = vadd.f32 0.0, %v1576
        %v1578 = vpop.f32.mrf.mxu0
        %1579 = vmatprep.mubr.bf16.mxu0 0
        %1580 = vmatmul.mubr.bf16.gmra.mxu0 %v1518
        %v1581 = vpop.f32.mrf.mxu0
        %v1582 = vadd.f32 0.0, %v1581
        %v1583 = vpop.f32.mrf.mxu0
        %v1584 = vpop.f32.mrf.mxu0
        %v1585 = vadd.f32 0.0, %v1584
        %v1586 = vpop.f32.mrf.mxu0
        %1587 = vdwg.mxu0
        %v1588 = vadd.f32 %v1358, %v1558
        %v1589 = vadd.f32 %v1359, %v1561
        %v1590 = vadd.f32 %v1360, %v1566
        %v1591 = vadd.f32 %v1361, %v1569
        %v1592 = vadd.f32 %v1362, %v1574
        %v1593 = vadd.f32 %v1363, %v1577
        %v1594 = vadd.f32 %v1364, %v1582
        %v1595 = vadd.f32 %v1365, %v1585
        %v1596 = vld [vmem:[%s2] sm:$0x1]
        %v1598 = vlaneseq
        %v1599 = vshrl.u32 %v1598, 7
        %v1600 = vsub.s32 0, %v1599
        %v1601 = vrot.slane %v1596, %v1600
        %v1603 = vadd.f32 %v1588, %v1601
        %v1604 = vadd.f32 %v1589, %v1601
        %v1605 = vadd.f32 %v1590, %v1601
        %v1606 = vadd.f32 %v1591, %v1601
        %v1607 = vadd.f32 %v1592, %v1601
        %v1608 = vadd.f32 %v1593, %v1601
        %v1609 = vadd.f32 %v1594, %v1601
        %v1610 = vadd.f32 %v1595, %v1601
        %v1611 = vld [vmem:[%s3] sm:$0x1]
        %vm1612 = vcmp.gt.f32.partialorder %v1603, 0.0
        %vm1613 = vcmp.gt.f32.partialorder %v1604, 0.0
        %vm1614 = vcmp.gt.f32.partialorder %v1605, 0.0
        %vm1615 = vcmp.gt.f32.partialorder %v1606, 0.0
        %vm1616 = vcmp.gt.f32.partialorder %v1607, 0.0
        %vm1617 = vcmp.gt.f32.partialorder %v1608, 0.0
        %vm1618 = vcmp.gt.f32.partialorder %v1609, 0.0
        %vm1619 = vcmp.gt.f32.partialorder %v1610, 0.0
        %v1621 = vlaneseq
        %v1622 = vshrl.u32 %v1621, 7
        %v1623 = vsub.s32 0, %v1622
        %v1624 = vrot.slane %v1611, %v1623
        %v1626 = vmul.f32 %v1624, %v1603
        %v1627 = vmul.f32 %v1624, %v1604
        %v1628 = vmul.f32 %v1624, %v1605
        %v1629 = vmul.f32 %v1624, %v1606
        %v1630 = vmul.f32 %v1624, %v1607
        %v1631 = vmul.f32 %v1624, %v1608
        %v1632 = vmul.f32 %v1624, %v1609
        %v1633 = vmul.f32 %v1624, %v1610
        %v1634 = vsel %vm1612, %v1603, %v1626
        %v1635 = vsel %vm1613, %v1604, %v1627
        %v1636 = vsel %vm1614, %v1605, %v1628
        %v1637 = vsel %vm1615, %v1606, %v1629
        %v1638 = vsel %vm1616, %v1607, %v1630
        %v1639 = vsel %vm1617, %v1608, %v1631
        %v1640 = vsel %vm1618, %v1609, %v1632
        %v1641 = vsel %vm1619, %v1610, %v1633
        %v1642 = vpack.c.bf16 %v1634, %v1634
        %v1643 = vpack.c.bf16 %v1635, %v1635
        %v1644 = vpack.c.bf16 %v1636, %v1636
        %v1645 = vpack.c.bf16 %v1637, %v1637
        %v1646 = vpack.c.bf16 %v1638, %v1638
        %v1647 = vpack.c.bf16 %v1639, %v1639
        %v1648 = vpack.c.bf16 %v1640, %v1640
        %v1649 = vpack.c.bf16 %v1641, %v1641
        %vm1650 = vcmask 125952
        %1651 = vst.msk [vmem:[%s193] sm:$0xf] %vm1650, %v1642
        %1652 = vst.msk [vmem:[%s193 + $0x4] sm:$0xf] %vm1650, %v1643
        %1653 = vst.msk [vmem:[%s193 + $0x8] sm:$0xf] %vm1650, %v1644
        %1654 = vst.msk [vmem:[%s193 + $0xc] sm:$0xf] %vm1650, %v1645
        %1655 = vst.msk [vmem:[%s193 + $0x10] sm:$0xf] %vm1650, %v1646
        %1656 = vst.msk [vmem:[%s193 + $0x14] sm:$0xf] %vm1650, %v1647
        %1657 = vst.msk [vmem:[%s193 + $0x18] sm:$0xf] %vm1650, %v1648
        %1658 = vst.msk [vmem:[%s193 + $0x1c] sm:$0xf] %vm1650, %v1649
        %s1659 = sand.u32 %s115, 1
        %s1660 = scalar_lea.sflag [#allocation3], %s1659
        %s1661 = sand.u32 %s115, 1
        %s1662 = smul.addr %s1661, 32
        %s1663 = scalar_lea.vmem [#allocation2], %s1662
        // Predicated region
        $region37: #{tpu_custom_call.1} parent=35 // pred_check
          %p1664 = pneg %p125
        $region38: #{tpu_custom_call.1} parent=35 // pred_check_branch
          %1666 = sbr.rel (%p1664) target = $region40
        $region39: #{tpu_custom_call.1} parent=35 // pred_region
          %s1668 = ssub.s32 512, 512
          %1669 = vsyncadd %s1660, %s1668
          %s1670 = smul.addr %s18, 8
          %s1671 = smul.addr %s1670, 64
          %s1672 = scalar_lea.hbm %s4, %s1671
          %s1673 = sshll.u32 %s1663, 4
          %s1674 = int_to_ptr.vmem [resolvable:$true] %s1673
          %1679 = dma.vmem_to_hbm [thread:$0]  %s1674, 512, %s1672, %s1660, 64, 64, 4
        $region40: #{tpu_custom_call.1} parent=35 // pred_fallthru
          _
      $region36: #{tpu_custom_call.1} parent=5 // pred_fallthru
        _
      %p1680 = scmp.le.s32.totalorder 2, %s13
      // Predicated region
      $region41: #{tpu_custom_call.1} parent=5 // pred_check
        %p1681 = pneg %p1680
      $region42: #{tpu_custom_call.1} parent=5 // pred_check_branch
        %1683 = sbr.rel (%p1681) target = $region44
      $region43: #{tpu_custom_call.1} parent=5 // pred_region
        %s1684 = ssub.s32 %s13, 2
        // Predicated region
        $region45: #{tpu_custom_call.1} parent=43 // pred_check
          %p1685 = pneg %p131
        $region46: #{tpu_custom_call.1} parent=43 // pred_check_branch
          %1687 = sbr.rel (%p1685) target = $region48
        $region47: #{tpu_custom_call.1} parent=43 // pred_region
          %s1688 = sand.u32 %s116, 1
          %s1689 = scalar_lea.sflag [#allocation3], %s1688
          %s1690 = sand.u32 %s116, 1
          %s1691 = smul.addr %s1690, 32
          %s1692 = scalar_lea.vmem [#allocation2], %s1691
          %1693 = dma.done %s1689, 512
        $region48: #{tpu_custom_call.1} parent=43 // pred_fallthru
          _
      $region44: #{tpu_custom_call.1} parent=5 // pred_fallthru
        _
    $region6: #{tpu_custom_call.1} parent=1 // loop_footer
      %s17 = sadd.s32 1, %s13
    $region7: #{tpu_custom_call.1} parent=1 // loop_footer_branch
      %12 = sbr.rel target = $region3
    $region8: #{tpu_custom_call.1} parent=1 // loop_exit
      _
    %1694 = vsyncpa [#allocation3], 1
    %s1695 = scalar_lea.sflag [#allocation3], 1
    %1696 = vsyncpa %s1695, 1

</llo_original>
